<compile_context>
chip_gen: v7x
topology: tpu7x:2x2x1
jax: 0.10.0
libtpu: 0.0.40
codegen_flags: <defaults>
</compile_context>

<pallas_src>
import math

import jax
import jax.numpy as jnp
from jax import lax
from jax.experimental import pallas as pl
from jax.experimental.pallas import tpu as pltpu

# Deterministic parameter init (FSRS3.init_w), 13 scalars.
INIT_W = jnp.array(
    [1.0, 1.0, 5.0, -0.5, -0.5, 0.2, 1.4, -0.2, 0.8, 2.0, -0.2, 0.2, 1.0],
    dtype=jnp.float32,
)

_LANE = 128          # lanes per vreg
_SUB = 8             # sublanes per f32 vreg -> batch tile = 8 * 128 = 1024
_LOG_09 = math.log(0.9)
_S_MIN, _S_MAX = 0.1, 36500.0
_MAX_SEQ_TILE = 256  # keeps the double-buffered VMEM working set <= ~8 MiB


def _fsrs3_kernel(w_ref, t_ref, g_ref, s_out_ref, d_out_ref, s_carry, d_carry):
    """w_ref: SMEM (13,); t/g/s/d refs: VMEM (seq_tile, tile_sub, 128);
    s_carry/d_carry: VMEM (tile_sub, 128) state carried across seq tiles."""
    seq_tile = t_ref.shape[0]
    si = pl.program_id(1)            # seq-tile index (innermost, "arbitrary")
    si_is_first = si == 0

    w = [w_ref[i] for i in range(13)]

    # Loop-invariant scalar work hoisted out of the recurrence.
    exp_w6 = jnp.exp(w[6])
    w5_w2 = w[5] * w[2]
    one_m_w5 = 1.0 - w[5]

    # Reset the carried state at the start of each batch tile's sequence.  Its
    # value is never used at global step 0 (the init branch is selected), but
    # a deterministic finite value keeps the discarded math clean.
    @pl.when(si_is_first)
    def _():
        s_carry[...] = jnp.ones_like(s_carry)
        d_carry[...] = jnp.ones_like(d_carry)

    def body(i, carry):
        s, d = carry                                       # (tile_sub, 128)
        xt = t_ref[i]                                      # elapsed time
        xg = g_ref[i]                                      # rating

        # ---- global step 0 (PyTorch `state == zeros` branch) ----
        s_init = w[0] + w[1] * (xg - 1.0)
        d_init = w[2] + w[3] * (xg - 3.0)

        # ---- recurrence ----
        # r = 0.9 ** (t / s): EUP approx reciprocal + one Newton step (f32
        # accurate, no full-precision divide).
        inv_s = pl.reciprocal(s, approx=True)
        inv_s = inv_s * (2.0 - s * inv_s)
        r = jnp.exp((_LOG_09 * xt) * inv_s)
        one_m_r = 1.0 - r

        d_rec = jnp.clip(w5_w2 + one_m_w5 * (d + w[4] * (xg - 3.0)), 1.0, 10.0)

        success = xg > 1.0
        ln_s = jnp.log(s)
        ln_d = jnp.log(d_rec)                              # d_rec in [1, 10]
        # success: exp_a = s**w7,       e_term = exp((1-r)*w8)
        # failure: exp_a = d**w10 * s**w11 * exp((1-r)*w12)  (fused in one exp)
        exp_a = jnp.exp(
            jnp.where(success, w[7] * ln_s,
                      w[10] * ln_d + w[11] * ln_s + one_m_r * w[12]))
        e_term = jnp.exp(jnp.where(success, one_m_r * w[8], 0.0))

        s_succ = s * (1.0 + exp_w6 * (11.0 - d_rec) * exp_a * (e_term - 1.0))
        s_fail = w[9] * exp_a
        s_rec = jnp.where(success, s_succ, s_fail)

        is_step0 = jnp.logical_and(si_is_first, i == 0)
        new_s = jnp.clip(jnp.where(is_step0, s_init, s_rec), _S_MIN, _S_MAX)
        new_d = jnp.clip(jnp.where(is_step0, d_init, d_rec), 1.0, 10.0)

        s_out_ref[i] = new_s                               # lane-dense stores
        d_out_ref[i] = new_d
        return (new_s, new_d)

    unroll = True if seq_tile <= 32 else 8
    s_fin, d_fin = lax.fori_loop(0, seq_tile, body,
                                 (s_carry[...], d_carry[...]), unroll=unroll)
    s_carry[...] = s_fin
    d_carry[...] = d_fin


def fsrs3_forward_planes(t, g, w=INIT_W, *, seq_tile=None):
    """Core entry point: t, g are f32[seq_len, batch] planes (preferred API).

    Returns (stability, difficulty) planes of shape [seq_len, batch].
    """
    seq_len, batch = t.shape
    t = t.astype(jnp.float32)
    g = g.astype(jnp.float32)

    # --- batch packing: (n_sub, 128) with tiles of at most 8 sublanes ---
    n_sub = (batch + _LANE - 1) // _LANE
    if n_sub > _SUB:
        tile_sub = _SUB
        n_sub = ((n_sub + _SUB - 1) // _SUB) * _SUB
    else:
        tile_sub = n_sub
    b_pad = n_sub * _LANE

    # --- seq tiling: bounded VMEM per block, state carried in VMEM scratch ---
    if seq_tile is None:
        n_seq_tiles = (seq_len + _MAX_SEQ_TILE - 1) // _MAX_SEQ_TILE
        seq_tile = (seq_len + n_seq_tiles - 1) // n_seq_tiles
    else:
        seq_tile = max(1, min(seq_tile, seq_len))
    n_seq_tiles = (seq_len + seq_tile - 1) // seq_tile
    s_pad = n_seq_tiles * seq_tile

    pad_b = b_pad - batch
    pad_s = s_pad - seq_len
    if pad_b or pad_s:
        # Benign padding (rating=1, dt=1): padded lanes/steps stay finite and
        # are sliced off afterwards.
        t = jnp.pad(t, ((0, pad_s), (0, pad_b)), constant_values=1.0)
        g = jnp.pad(g, ((0, pad_s), (0, pad_b)), constant_values=1.0)

    t3 = t.reshape(s_pad, n_sub, _LANE)
    g3 = g.reshape(s_pad, n_sub, _LANE)

    blk = (seq_tile, tile_sub, _LANE)
    idx = lambda b, s: (s, b, 0)
    num_batch_tiles = n_sub // tile_sub

    # Double-buffered VMEM: 4 planes x 2 buffers x seq_tile x tile_sub x 128 x 4B.
    work_bytes = 4 * 2 * seq_tile * tile_sub * _LANE * 4
    vmem_limit = None
    if work_bytes > 24 * 1024 * 1024:
        vmem_limit = min(work_bytes + (8 << 20), 64 * 1024 * 1024)

    s3, d3 = pl.pallas_call(
        _fsrs3_kernel,
        out_shape=(
            jax.ShapeDtypeStruct((s_pad, n_sub, _LANE), jnp.float32),
            jax.ShapeDtypeStruct((s_pad, n_sub, _LANE), jnp.float32),
        ),
        grid_spec=pltpu.PrefetchScalarGridSpec(
            num_scalar_prefetch=0,
            grid=(num_batch_tiles, n_seq_tiles),
            in_specs=[
                pl.BlockSpec(memory_space=pltpu.MemorySpace.SMEM),  # w scalars
                pl.BlockSpec(blk, idx),                             # elapsed time
                pl.BlockSpec(blk, idx),                             # rating
            ],
            out_specs=(
                pl.BlockSpec(blk, idx),                             # stability
                pl.BlockSpec(blk, idx),                             # difficulty
            ),
            scratch_shapes=[
                pltpu.VMEM((tile_sub, _LANE), jnp.float32),         # s carry
                pltpu.VMEM((tile_sub, _LANE), jnp.float32),         # d carry
            ],
        ),
        compiler_params=pltpu.CompilerParams(
            dimension_semantics=("parallel", "arbitrary"),
            vmem_limit_bytes=vmem_limit,
        ),
    )(w.astype(jnp.float32), t3, g3)

    s = s3.reshape(s_pad, b_pad)[:seq_len, :batch]
    d = d3.reshape(s_pad, b_pad)[:seq_len, :batch]
    return s, d


def fsrs3_forward(inputs, w=INIT_W, *, seq_tile=None):
    """PyTorch-parity interface: inputs f32[seq_len, batch, 2].

    Returns (outputs[seq, batch, 2], final_state[batch, 2]).
    NOTE: production callers should keep the two planes separate end-to-end
    (fsrs3_forward_planes); the de-interleave/stack here only matches the
    nn.Module signature.
    """
    t = inputs[:, :, 0]
    g = inputs[:, :, 1]
    s, d = fsrs3_forward_planes(t, g, w, seq_tile=seq_tile)
    outputs = jnp.stack([s, d], axis=-1)
    return outputs, outputs[-1]


def fsrs3_ref(inputs, w=INIT_W):
    """Pure-JAX reference matching the PyTorch forward exactly."""
    seq_len, batch, _ = inputs.shape
    state = jnp.zeros((batch, 2), jnp.float32)
    outs = []
    for i in range(seq_len):
        X = inputs[i]
        if i == 0:
            new_s = w[0] + w[1] * (X[:, 1] - 1.0)
            new_d = jnp.clip(w[2] + w[3] * (X[:, 1] - 3.0), 1.0, 10.0)
        else:
            r = jnp.power(jnp.float32(0.9), X[:, 0] / state[:, 0])
            new_d = state[:, 1] + w[4] * (X[:, 1] - 3.0)
            new_d = w[5] * w[2] + (1.0 - w[5]) * new_d
            new_d = jnp.clip(new_d, 1.0, 10.0)
            succ = state[:, 0] * (1.0 + jnp.exp(w[6]) * (11.0 - new_d)
                                  * jnp.power(state[:, 0], w[7])
                                  * (jnp.exp((1.0 - r) * w[8]) - 1.0))
            fail = (w[9] * jnp.power(new_d, w[10])
                    * jnp.power(state[:, 0], w[11])
                    * jnp.exp((1.0 - r) * w[12]))
            new_s = jnp.where(X[:, 1] > 1.0, succ, fail)
        new_s = jnp.clip(new_s, 0.1, 36500.0)
        state = jnp.stack([new_s, new_d], axis=1)
        outs.append(state)
    return jnp.stack(outs), state


if __name__ == "__main__":
    key = jax.random.PRNGKey(0)
    k_t, k_g, k_t2, k_g2 = jax.random.split(key, 4)

    # --- primary small-shape check (matches the module's expected usage) ---
    seq_len, batch = 8, 8
    elapsed = jax.random.uniform(k_t, (seq_len, batch), jnp.float32, 0.5, 30.0)
    rating = jax.random.randint(k_g, (seq_len, batch), 1, 5).astype(jnp.float32)
    inputs = jnp.stack([elapsed, rating], axis=-1)     # [seq_len, batch, 2]

    outputs, state = jax.jit(fsrs3_forward)(inputs)
    jax.block_until_ready((outputs, state))

    ref_outputs, ref_state = fsrs3_ref(inputs)
    assert jnp.allclose(outputs, ref_outputs, rtol=2e-3, atol=2e-3), "outputs mismatch"
    assert jnp.allclose(state, ref_state, rtol=2e-3, atol=2e-3), "state mismatch"

    # --- secondary check: exercises seq-tile carry + batch padding paths ---
    seq2, batch2 = 40, 200
    elapsed2 = jax.random.uniform(k_t2, (seq2, batch2), jnp.float32, 0.5, 30.0)
    rating2 = jax.random.randint(k_g2, (seq2, batch2), 1, 5).astype(jnp.float32)
    inputs2 = jnp.stack([elapsed2, rating2], axis=-1)

    out2, st2 = jax.jit(lambda x: fsrs3_forward(x, seq_tile=16))(inputs2)
    jax.block_until_ready((out2, st2))

    ref2, refst2 = fsrs3_ref(inputs2)
    assert jnp.allclose(out2, ref2, rtol=2e-3, atol=2e-3), "outputs mismatch (tiled seq)"
    assert jnp.allclose(st2, refst2, rtol=2e-3, atol=2e-3), "state mismatch (tiled seq)"

    print("KERNEL_OK")
</pallas_src>

<mosaic_0001>
module attributes {stable_mosaic.version = 11 : i64} {
  func.func @_fsrs3_kernel(%arg0: i32, %arg1: i32, %arg2: memref<13xf32, #tpu.memory_space<smem>>, %arg3: memref<8x1x128xf32, #tpu.memory_space<vmem>>, %arg4: memref<8x1x128xf32, #tpu.memory_space<vmem>>, %arg5: memref<8x1x128xf32, #tpu.memory_space<vmem>>, %arg6: memref<8x1x128xf32, #tpu.memory_space<vmem>>, %arg7: memref<1x128xf32, #tpu.memory_space<vmem>>, %arg8: memref<1x128xf32, #tpu.memory_space<vmem>>) attributes {dimension_semantics = [#tpu.dimension_semantics<parallel>, #tpu.dimension_semantics<arbitrary>], iteration_bounds = array<i64: 1, 1>, scalar_prefetch = 0 : i64, scratch_operands = 2 : i64, tpu.core_type = #tpu.core_type<tc>, window_params = [{transform_indices = @transform_0, window_bounds = array<i64: 13>}, {transform_indices = @transform_1, window_bounds = array<i64: 8, 1, 128>}, {transform_indices = @transform_2, window_bounds = array<i64: 8, 1, 128>}, {transform_indices = @transform_3, window_bounds = array<i64: 8, 1, 128>}, {transform_indices = @transform_4, window_bounds = array<i64: 8, 1, 128>}]} {
    %c0_i32 = arith.constant 0 : i32
    %0 = arith.cmpi eq, %arg1, %c0_i32 : i32
    %c0 = arith.constant 0 : index
    %1 = memref.load %arg2[%c0] : memref<13xf32, #tpu.memory_space<smem>>
    %c1 = arith.constant 1 : index
    %2 = memref.load %arg2[%c1] : memref<13xf32, #tpu.memory_space<smem>>
    %c2 = arith.constant 2 : index
    %3 = memref.load %arg2[%c2] : memref<13xf32, #tpu.memory_space<smem>>
    %c3 = arith.constant 3 : index
    %4 = memref.load %arg2[%c3] : memref<13xf32, #tpu.memory_space<smem>>
    %c4 = arith.constant 4 : index
    %5 = memref.load %arg2[%c4] : memref<13xf32, #tpu.memory_space<smem>>
    %c5 = arith.constant 5 : index
    %6 = memref.load %arg2[%c5] : memref<13xf32, #tpu.memory_space<smem>>
    %c6 = arith.constant 6 : index
    %7 = memref.load %arg2[%c6] : memref<13xf32, #tpu.memory_space<smem>>
    %c7 = arith.constant 7 : index
    %8 = memref.load %arg2[%c7] : memref<13xf32, #tpu.memory_space<smem>>
    %c8 = arith.constant 8 : index
    %9 = memref.load %arg2[%c8] : memref<13xf32, #tpu.memory_space<smem>>
    %c9 = arith.constant 9 : index
    %10 = memref.load %arg2[%c9] : memref<13xf32, #tpu.memory_space<smem>>
    %c10 = arith.constant 10 : index
    %11 = memref.load %arg2[%c10] : memref<13xf32, #tpu.memory_space<smem>>
    %c11 = arith.constant 11 : index
    %12 = memref.load %arg2[%c11] : memref<13xf32, #tpu.memory_space<smem>>
    %c12 = arith.constant 12 : index
    %13 = memref.load %arg2[%c12] : memref<13xf32, #tpu.memory_space<smem>>
    %14 = math.exp %7 : f32
    %15 = arith.mulf %6, %3 : f32
    %cst = arith.constant 1.000000e+00 : f32
    %16 = arith.subf %cst, %6 : f32
    %17 = arith.extui %0 : i1 to i32
    %c0_i32_0 = arith.constant 0 : i32
    %18 = arith.cmpi ne, %17, %c0_i32_0 : i32
    scf.if %18 {
      %cst_218 = arith.constant 1.000000e+00 : f32
      %799 = vector.broadcast %cst_218 : f32 to vector<1x128xf32>
      %c0_219 = arith.constant 0 : index
      %c0_220 = arith.constant 0 : index
      %800 = vector.load %arg7[%c0_219, %c0_220] : memref<1x128xf32, #tpu.memory_space<vmem>>, vector<1x128xf32>
      tpu.vector_store %arg7[%c0_219, %c0_220], %799 {strides = array<i32>} : memref<1x128xf32, #tpu.memory_space<vmem>>, vector<1x128xf32>,
      %cst_221 = arith.constant 1.000000e+00 : f32
      %801 = vector.broadcast %cst_221 : f32 to vector<1x128xf32>
      %c0_222 = arith.constant 0 : index
      %c0_223 = arith.constant 0 : index
      %802 = vector.load %arg8[%c0_222, %c0_223] : memref<1x128xf32, #tpu.memory_space<vmem>>, vector<1x128xf32>
      tpu.vector_store %arg8[%c0_222, %c0_223], %801 {strides = array<i32>} : memref<1x128xf32, #tpu.memory_space<vmem>>, vector<1x128xf32>,
    } else {
    }
    %c0_1 = arith.constant 0 : index
    %c0_2 = arith.constant 0 : index
    %19 = vector.load %arg7[%c0_1, %c0_2] : memref<1x128xf32, #tpu.memory_space<vmem>>, vector<1x128xf32>
    %c0_3 = arith.constant 0 : index
    %c0_4 = arith.constant 0 : index
    %20 = vector.load %arg8[%c0_3, %c0_4] : memref<1x128xf32, #tpu.memory_space<vmem>>, vector<1x128xf32>
    %c0_i32_5 = arith.constant 0 : i32
    %21 = arith.index_cast %c0_i32_5 : i32 to index
    %c0_6 = arith.constant 0 : index
    %c0_7 = arith.constant 0 : index
    %22 = vector.load %arg3[%21, %c0_6, %c0_7] : memref<8x1x128xf32, #tpu.memory_space<vmem>>, vector<1x1x128xf32>
    %23 = vector.shape_cast %22 : vector<1x1x128xf32> to vector<1x128xf32>
    %24 = arith.index_cast %c0_i32_5 : i32 to index
    %c0_8 = arith.constant 0 : index
    %c0_9 = arith.constant 0 : index
    %25 = vector.load %arg4[%24, %c0_8, %c0_9] : memref<8x1x128xf32, #tpu.memory_space<vmem>>, vector<1x1x128xf32>
    %26 = vector.shape_cast %25 : vector<1x1x128xf32> to vector<1x128xf32>
    %cst_10 = arith.constant 1.000000e+00 : f32
    %27 = vector.broadcast %cst_10 : f32 to vector<1x128xf32>
    %28 = arith.subf %26, %27 : vector<1x128xf32>
    %29 = vector.broadcast %2 : f32 to vector<1x128xf32>
    %30 = arith.mulf %29, %28 : vector<1x128xf32>
    %31 = vector.broadcast %1 : f32 to vector<1x128xf32>
    %32 = arith.addf %31, %30 : vector<1x128xf32>
    %cst_11 = arith.constant 3.000000e+00 : f32
    %33 = vector.broadcast %cst_11 : f32 to vector<1x128xf32>
    %34 = arith.subf %26, %33 : vector<1x128xf32>
    %35 = vector.broadcast %4 : f32 to vector<1x128xf32>
    %36 = arith.mulf %35, %34 : vector<1x128xf32>
    %37 = vector.broadcast %3 : f32 to vector<1x128xf32>
    %38 = arith.addf %37, %36 : vector<1x128xf32>
    %39 = tpu.reciprocal %19 {approx = true} : vector<1x128xf32> -> vector<1x128xf32>
    %40 = arith.mulf %19, %39 : vector<1x128xf32>
    %cst_12 = arith.constant 2.000000e+00 : f32
    %41 = vector.broadcast %cst_12 : f32 to vector<1x128xf32>
    %42 = arith.subf %41, %40 : vector<1x128xf32>
    %43 = arith.mulf %39, %42 : vector<1x128xf32>
    %cst_13 = arith.constant -0.105360515 : f32
    %44 = vector.broadcast %cst_13 : f32 to vector<1x128xf32>
    %45 = arith.mulf %44, %23 : vector<1x128xf32>
    %46 = arith.mulf %45, %43 : vector<1x128xf32>
    %47 = math.exp %46 : vector<1x128xf32>
    %cst_14 = arith.constant 1.000000e+00 : f32
    %48 = vector.broadcast %cst_14 : f32 to vector<1x128xf32>
    %49 = arith.subf %48, %47 : vector<1x128xf32>
    %cst_15 = arith.constant 3.000000e+00 : f32
    %50 = vector.broadcast %cst_15 : f32 to vector<1x128xf32>
    %51 = arith.subf %26, %50 : vector<1x128xf32>
    %52 = vector.broadcast %5 : f32 to vector<1x128xf32>
    %53 = arith.mulf %52, %51 : vector<1x128xf32>
    %54 = arith.addf %20, %53 : vector<1x128xf32>
    %55 = vector.broadcast %16 : f32 to vector<1x128xf32>
    %56 = arith.mulf %55, %54 : vector<1x128xf32>
    %57 = vector.broadcast %15 : f32 to vector<1x128xf32>
    %58 = arith.addf %57, %56 : vector<1x128xf32>
    %cst_16 = arith.constant 1.000000e+00 : f32
    %cst_17 = arith.constant 1.000000e+01 : f32
    %59 = vector.broadcast %cst_16 : f32 to vector<1x128xf32>
    %60 = arith.maximumf %59, %58 : vector<1x128xf32>
    %61 = vector.broadcast %cst_17 : f32 to vector<1x128xf32>
    %62 = arith.minimumf %61, %60 : vector<1x128xf32>
    %cst_18 = arith.constant 1.000000e+00 : f32
    %63 = vector.broadcast %cst_18 : f32 to vector<1x128xf32>
    %64 = arith.cmpf ogt, %26, %63 : vector<1x128xf32>
    %65 = math.log %19 : vector<1x128xf32>
    %66 = math.log %62 : vector<1x128xf32>
    %67 = vector.broadcast %8 : f32 to vector<1x128xf32>
    %68 = arith.mulf %67, %65 : vector<1x128xf32>
    %69 = vector.broadcast %11 : f32 to vector<1x128xf32>
    %70 = arith.mulf %69, %66 : vector<1x128xf32>
    %71 = vector.broadcast %12 : f32 to vector<1x128xf32>
    %72 = arith.mulf %71, %65 : vector<1x128xf32>
    %73 = arith.addf %70, %72 : vector<1x128xf32>
    %74 = vector.broadcast %13 : f32 to vector<1x128xf32>
    %75 = arith.mulf %49, %74 : vector<1x128xf32>
    %76 = arith.addf %73, %75 : vector<1x128xf32>
    %77 = arith.select %64, %68, %76 : vector<1x128xi1>, vector<1x128xf32>
    %78 = math.exp %77 : vector<1x128xf32>
    %79 = vector.broadcast %9 : f32 to vector<1x128xf32>
    %80 = arith.mulf %49, %79 : vector<1x128xf32>
    %cst_19 = arith.constant 0.000000e+00 : f32
    %81 = vector.broadcast %cst_19 : f32 to vector<1x128xf32>
    %82 = arith.select %64, %80, %81 : vector<1x128xi1>, vector<1x128xf32>
    %83 = math.exp %82 : vector<1x128xf32>
    %cst_20 = arith.constant 1.100000e+01 : f32
    %84 = vector.broadcast %cst_20 : f32 to vector<1x128xf32>
    %85 = arith.subf %84, %62 : vector<1x128xf32>
    %86 = vector.broadcast %14 : f32 to vector<1x128xf32>
    %87 = arith.mulf %86, %85 : vector<1x128xf32>
    %88 = arith.mulf %87, %78 : vector<1x128xf32>
    %cst_21 = arith.constant 1.000000e+00 : f32
    %89 = vector.broadcast %cst_21 : f32 to vector<1x128xf32>
    %90 = arith.subf %83, %89 : vector<1x128xf32>
    %91 = arith.mulf %88, %90 : vector<1x128xf32>
    %cst_22 = arith.constant 1.000000e+00 : f32
    %92 = vector.broadcast %cst_22 : f32 to vector<1x128xf32>
    %93 = arith.addf %92, %91 : vector<1x128xf32>
    %94 = arith.mulf %19, %93 : vector<1x128xf32>
    %95 = vector.broadcast %10 : f32 to vector<1x128xf32>
    %96 = arith.mulf %95, %78 : vector<1x128xf32>
    %97 = arith.select %64, %94, %96 : vector<1x128xi1>, vector<1x128xf32>
    %c0_i32_23 = arith.constant 0 : i32
    %98 = arith.cmpi eq, %c0_i32_5, %c0_i32_23 : i32
    %99 = arith.andi %0, %98 : i1
    %100 = arith.select %99, %32, %97 : vector<1x128xf32>
    %cst_24 = arith.constant 1.000000e-01 : f32
    %cst_25 = arith.constant 3.650000e+04 : f32
    %101 = vector.broadcast %cst_24 : f32 to vector<1x128xf32>
    %102 = arith.maximumf %101, %100 : vector<1x128xf32>
    %103 = vector.broadcast %cst_25 : f32 to vector<1x128xf32>
    %104 = arith.minimumf %103, %102 : vector<1x128xf32>
    %105 = arith.select %99, %38, %62 : vector<1x128xf32>
    %cst_26 = arith.constant 1.000000e+00 : f32
    %cst_27 = arith.constant 1.000000e+01 : f32
    %106 = vector.broadcast %cst_26 : f32 to vector<1x128xf32>
    %107 = arith.maximumf %106, %105 : vector<1x128xf32>
    %108 = vector.broadcast %cst_27 : f32 to vector<1x128xf32>
    %109 = arith.minimumf %108, %107 : vector<1x128xf32>
    %110 = arith.index_cast %c0_i32_5 : i32 to index
    %c0_28 = arith.constant 0 : index
    %c0_29 = arith.constant 0 : index
    %111 = vector.load %arg5[%110, %c0_28, %c0_29] : memref<8x1x128xf32, #tpu.memory_space<vmem>>, vector<1x1x128xf32>
    %112 = vector.shape_cast %111 : vector<1x1x128xf32> to vector<1x128xf32>
    %113 = vector.shape_cast %104 : vector<1x128xf32> to vector<1x1x128xf32>
    tpu.vector_store %arg5[%110, %c0_28, %c0_29], %113 {strides = array<i32>} : memref<8x1x128xf32, #tpu.memory_space<vmem>>, vector<1x1x128xf32>,
    %114 = arith.index_cast %c0_i32_5 : i32 to index
    %c0_30 = arith.constant 0 : index
    %c0_31 = arith.constant 0 : index
    %115 = vector.load %arg6[%114, %c0_30, %c0_31] : memref<8x1x128xf32, #tpu.memory_space<vmem>>, vector<1x1x128xf32>
    %116 = vector.shape_cast %115 : vector<1x1x128xf32> to vector<1x128xf32>
    %117 = vector.shape_cast %109 : vector<1x128xf32> to vector<1x1x128xf32>
    tpu.vector_store %arg6[%114, %c0_30, %c0_31], %117 {strides = array<i32>} : memref<8x1x128xf32, #tpu.memory_space<vmem>>, vector<1x1x128xf32>,
    %c1_i32 = arith.constant 1 : i32
    %118 = arith.index_cast %c1_i32 : i32 to index
    %c0_32 = arith.constant 0 : index
    %c0_33 = arith.constant 0 : index
    %119 = vector.load %arg3[%118, %c0_32, %c0_33] : memref<8x1x128xf32, #tpu.memory_space<vmem>>, vector<1x1x128xf32>
    %120 = vector.shape_cast %119 : vector<1x1x128xf32> to vector<1x128xf32>
    %121 = arith.index_cast %c1_i32 : i32 to index
    %c0_34 = arith.constant 0 : index
    %c0_35 = arith.constant 0 : index
    %122 = vector.load %arg4[%121, %c0_34, %c0_35] : memref<8x1x128xf32, #tpu.memory_space<vmem>>, vector<1x1x128xf32>
    %123 = vector.shape_cast %122 : vector<1x1x128xf32> to vector<1x128xf32>
    %cst_36 = arith.constant 1.000000e+00 : f32
    %124 = vector.broadcast %cst_36 : f32 to vector<1x128xf32>
    %125 = arith.subf %123, %124 : vector<1x128xf32>
    %126 = vector.broadcast %2 : f32 to vector<1x128xf32>
    %127 = arith.mulf %126, %125 : vector<1x128xf32>
    %128 = vector.broadcast %1 : f32 to vector<1x128xf32>
    %129 = arith.addf %128, %127 : vector<1x128xf32>
    %cst_37 = arith.constant 3.000000e+00 : f32
    %130 = vector.broadcast %cst_37 : f32 to vector<1x128xf32>
    %131 = arith.subf %123, %130 : vector<1x128xf32>
    %132 = vector.broadcast %4 : f32 to vector<1x128xf32>
    %133 = arith.mulf %132, %131 : vector<1x128xf32>
    %134 = vector.broadcast %3 : f32 to vector<1x128xf32>
    %135 = arith.addf %134, %133 : vector<1x128xf32>
    %136 = tpu.reciprocal %104 {approx = true} : vector<1x128xf32> -> vector<1x128xf32>
    %137 = arith.mulf %104, %136 : vector<1x128xf32>
    %cst_38 = arith.constant 2.000000e+00 : f32
    %138 = vector.broadcast %cst_38 : f32 to vector<1x128xf32>
    %139 = arith.subf %138, %137 : vector<1x128xf32>
    %140 = arith.mulf %136, %139 : vector<1x128xf32>
    %cst_39 = arith.constant -0.105360515 : f32
    %141 = vector.broadcast %cst_39 : f32 to vector<1x128xf32>
    %142 = arith.mulf %141, %120 : vector<1x128xf32>
    %143 = arith.mulf %142, %140 : vector<1x128xf32>
    %144 = math.exp %143 : vector<1x128xf32>
    %cst_40 = arith.constant 1.000000e+00 : f32
    %145 = vector.broadcast %cst_40 : f32 to vector<1x128xf32>
    %146 = arith.subf %145, %144 : vector<1x128xf32>
    %cst_41 = arith.constant 3.000000e+00 : f32
    %147 = vector.broadcast %cst_41 : f32 to vector<1x128xf32>
    %148 = arith.subf %123, %147 : vector<1x128xf32>
    %149 = vector.broadcast %5 : f32 to vector<1x128xf32>
    %150 = arith.mulf %149, %148 : vector<1x128xf32>
    %151 = arith.addf %109, %150 : vector<1x128xf32>
    %152 = vector.broadcast %16 : f32 to vector<1x128xf32>
    %153 = arith.mulf %152, %151 : vector<1x128xf32>
    %154 = vector.broadcast %15 : f32 to vector<1x128xf32>
    %155 = arith.addf %154, %153 : vector<1x128xf32>
    %cst_42 = arith.constant 1.000000e+00 : f32
    %cst_43 = arith.constant 1.000000e+01 : f32
    %156 = vector.broadcast %cst_42 : f32 to vector<1x128xf32>
    %157 = arith.maximumf %156, %155 : vector<1x128xf32>
    %158 = vector.broadcast %cst_43 : f32 to vector<1x128xf32>
    %159 = arith.minimumf %158, %157 : vector<1x128xf32>
    %cst_44 = arith.constant 1.000000e+00 : f32
    %160 = vector.broadcast %cst_44 : f32 to vector<1x128xf32>
    %161 = arith.cmpf ogt, %123, %160 : vector<1x128xf32>
    %162 = math.log %104 : vector<1x128xf32>
    %163 = math.log %159 : vector<1x128xf32>
    %164 = vector.broadcast %8 : f32 to vector<1x128xf32>
    %165 = arith.mulf %164, %162 : vector<1x128xf32>
    %166 = vector.broadcast %11 : f32 to vector<1x128xf32>
    %167 = arith.mulf %166, %163 : vector<1x128xf32>
    %168 = vector.broadcast %12 : f32 to vector<1x128xf32>
    %169 = arith.mulf %168, %162 : vector<1x128xf32>
    %170 = arith.addf %167, %169 : vector<1x128xf32>
    %171 = vector.broadcast %13 : f32 to vector<1x128xf32>
    %172 = arith.mulf %146, %171 : vector<1x128xf32>
    %173 = arith.addf %170, %172 : vector<1x128xf32>
    %174 = arith.select %161, %165, %173 : vector<1x128xi1>, vector<1x128xf32>
    %175 = math.exp %174 : vector<1x128xf32>
    %176 = vector.broadcast %9 : f32 to vector<1x128xf32>
    %177 = arith.mulf %146, %176 : vector<1x128xf32>
    %cst_45 = arith.constant 0.000000e+00 : f32
    %178 = vector.broadcast %cst_45 : f32 to vector<1x128xf32>
    %179 = arith.select %161, %177, %178 : vector<1x128xi1>, vector<1x128xf32>
    %180 = math.exp %179 : vector<1x128xf32>
    %cst_46 = arith.constant 1.100000e+01 : f32
    %181 = vector.broadcast %cst_46 : f32 to vector<1x128xf32>
    %182 = arith.subf %181, %159 : vector<1x128xf32>
    %183 = vector.broadcast %14 : f32 to vector<1x128xf32>
    %184 = arith.mulf %183, %182 : vector<1x128xf32>
    %185 = arith.mulf %184, %175 : vector<1x128xf32>
    %cst_47 = arith.constant 1.000000e+00 : f32
    %186 = vector.broadcast %cst_47 : f32 to vector<1x128xf32>
    %187 = arith.subf %180, %186 : vector<1x128xf32>
    %188 = arith.mulf %185, %187 : vector<1x128xf32>
    %cst_48 = arith.constant 1.000000e+00 : f32
    %189 = vector.broadcast %cst_48 : f32 to vector<1x128xf32>
    %190 = arith.addf %189, %188 : vector<1x128xf32>
    %191 = arith.mulf %104, %190 : vector<1x128xf32>
    %192 = vector.broadcast %10 : f32 to vector<1x128xf32>
    %193 = arith.mulf %192, %175 : vector<1x128xf32>
    %194 = arith.select %161, %191, %193 : vector<1x128xi1>, vector<1x128xf32>
    %c0_i32_49 = arith.constant 0 : i32
    %195 = arith.cmpi eq, %c1_i32, %c0_i32_49 : i32
    %196 = arith.andi %0, %195 : i1
    %197 = arith.select %196, %129, %194 : vector<1x128xf32>
    %cst_50 = arith.constant 1.000000e-01 : f32
    %cst_51 = arith.constant 3.650000e+04 : f32
    %198 = vector.broadcast %cst_50 : f32 to vector<1x128xf32>
    %199 = arith.maximumf %198, %197 : vector<1x128xf32>
    %200 = vector.broadcast %cst_51 : f32 to vector<1x128xf32>
    %201 = arith.minimumf %200, %199 : vector<1x128xf32>
    %202 = arith.select %196, %135, %159 : vector<1x128xf32>
    %cst_52 = arith.constant 1.000000e+00 : f32
    %cst_53 = arith.constant 1.000000e+01 : f32
    %203 = vector.broadcast %cst_52 : f32 to vector<1x128xf32>
    %204 = arith.maximumf %203, %202 : vector<1x128xf32>
    %205 = vector.broadcast %cst_53 : f32 to vector<1x128xf32>
    %206 = arith.minimumf %205, %204 : vector<1x128xf32>
    %207 = arith.index_cast %c1_i32 : i32 to index
    %c0_54 = arith.constant 0 : index
    %c0_55 = arith.constant 0 : index
    %208 = vector.load %arg5[%207, %c0_54, %c0_55] : memref<8x1x128xf32, #tpu.memory_space<vmem>>, vector<1x1x128xf32>
    %209 = vector.shape_cast %208 : vector<1x1x128xf32> to vector<1x128xf32>
    %210 = vector.shape_cast %201 : vector<1x128xf32> to vector<1x1x128xf32>
    tpu.vector_store %arg5[%207, %c0_54, %c0_55], %210 {strides = array<i32>} : memref<8x1x128xf32, #tpu.memory_space<vmem>>, vector<1x1x128xf32>,
    %211 = arith.index_cast %c1_i32 : i32 to index
    %c0_56 = arith.constant 0 : index
    %c0_57 = arith.constant 0 : index
    %212 = vector.load %arg6[%211, %c0_56, %c0_57] : memref<8x1x128xf32, #tpu.memory_space<vmem>>, vector<1x1x128xf32>
    %213 = vector.shape_cast %212 : vector<1x1x128xf32> to vector<1x128xf32>
    %214 = vector.shape_cast %206 : vector<1x128xf32> to vector<1x1x128xf32>
    tpu.vector_store %arg6[%211, %c0_56, %c0_57], %214 {strides = array<i32>} : memref<8x1x128xf32, #tpu.memory_space<vmem>>, vector<1x1x128xf32>,
    %c2_i32 = arith.constant 2 : i32
    %215 = arith.index_cast %c2_i32 : i32 to index
    %c0_58 = arith.constant 0 : index
    %c0_59 = arith.constant 0 : index
    %216 = vector.load %arg3[%215, %c0_58, %c0_59] : memref<8x1x128xf32, #tpu.memory_space<vmem>>, vector<1x1x128xf32>
    %217 = vector.shape_cast %216 : vector<1x1x128xf32> to vector<1x128xf32>
    %218 = arith.index_cast %c2_i32 : i32 to index
    %c0_60 = arith.constant 0 : index
    %c0_61 = arith.constant 0 : index
    %219 = vector.load %arg4[%218, %c0_60, %c0_61] : memref<8x1x128xf32, #tpu.memory_space<vmem>>, vector<1x1x128xf32>
    %220 = vector.shape_cast %219 : vector<1x1x128xf32> to vector<1x128xf32>
    %cst_62 = arith.constant 1.000000e+00 : f32
    %221 = vector.broadcast %cst_62 : f32 to vector<1x128xf32>
    %222 = arith.subf %220, %221 : vector<1x128xf32>
    %223 = vector.broadcast %2 : f32 to vector<1x128xf32>
    %224 = arith.mulf %223, %222 : vector<1x128xf32>
    %225 = vector.broadcast %1 : f32 to vector<1x128xf32>
    %226 = arith.addf %225, %224 : vector<1x128xf32>
    %cst_63 = arith.constant 3.000000e+00 : f32
    %227 = vector.broadcast %cst_63 : f32 to vector<1x128xf32>
    %228 = arith.subf %220, %227 : vector<1x128xf32>
    %229 = vector.broadcast %4 : f32 to vector<1x128xf32>
    %230 = arith.mulf %229, %228 : vector<1x128xf32>
    %231 = vector.broadcast %3 : f32 to vector<1x128xf32>
    %232 = arith.addf %231, %230 : vector<1x128xf32>
    %233 = tpu.reciprocal %201 {approx = true} : vector<1x128xf32> -> vector<1x128xf32>
    %234 = arith.mulf %201, %233 : vector<1x128xf32>
    %cst_64 = arith.constant 2.000000e+00 : f32
    %235 = vector.broadcast %cst_64 : f32 to vector<1x128xf32>
    %236 = arith.subf %235, %234 : vector<1x128xf32>
    %237 = arith.mulf %233, %236 : vector<1x128xf32>
    %cst_65 = arith.constant -0.105360515 : f32
    %238 = vector.broadcast %cst_65 : f32 to vector<1x128xf32>
    %239 = arith.mulf %238, %217 : vector<1x128xf32>
    %240 = arith.mulf %239, %237 : vector<1x128xf32>
    %241 = math.exp %240 : vector<1x128xf32>
    %cst_66 = arith.constant 1.000000e+00 : f32
    %242 = vector.broadcast %cst_66 : f32 to vector<1x128xf32>
    %243 = arith.subf %242, %241 : vector<1x128xf32>
    %cst_67 = arith.constant 3.000000e+00 : f32
    %244 = vector.broadcast %cst_67 : f32 to vector<1x128xf32>
    %245 = arith.subf %220, %244 : vector<1x128xf32>
    %246 = vector.broadcast %5 : f32 to vector<1x128xf32>
    %247 = arith.mulf %246, %245 : vector<1x128xf32>
    %248 = arith.addf %206, %247 : vector<1x128xf32>
    %249 = vector.broadcast %16 : f32 to vector<1x128xf32>
    %250 = arith.mulf %249, %248 : vector<1x128xf32>
    %251 = vector.broadcast %15 : f32 to vector<1x128xf32>
    %252 = arith.addf %251, %250 : vector<1x128xf32>
    %cst_68 = arith.constant 1.000000e+00 : f32
    %cst_69 = arith.constant 1.000000e+01 : f32
    %253 = vector.broadcast %cst_68 : f32 to vector<1x128xf32>
    %254 = arith.maximumf %253, %252 : vector<1x128xf32>
    %255 = vector.broadcast %cst_69 : f32 to vector<1x128xf32>
    %256 = arith.minimumf %255, %254 : vector<1x128xf32>
    %cst_70 = arith.constant 1.000000e+00 : f32
    %257 = vector.broadcast %cst_70 : f32 to vector<1x128xf32>
    %258 = arith.cmpf ogt, %220, %257 : vector<1x128xf32>
    %259 = math.log %201 : vector<1x128xf32>
    %260 = math.log %256 : vector<1x128xf32>
    %261 = vector.broadcast %8 : f32 to vector<1x128xf32>
    %262 = arith.mulf %261, %259 : vector<1x128xf32>
    %263 = vector.broadcast %11 : f32 to vector<1x128xf32>
    %264 = arith.mulf %263, %260 : vector<1x128xf32>
    %265 = vector.broadcast %12 : f32 to vector<1x128xf32>
    %266 = arith.mulf %265, %259 : vector<1x128xf32>
    %267 = arith.addf %264, %266 : vector<1x128xf32>
    %268 = vector.broadcast %13 : f32 to vector<1x128xf32>
    %269 = arith.mulf %243, %268 : vector<1x128xf32>
    %270 = arith.addf %267, %269 : vector<1x128xf32>
    %271 = arith.select %258, %262, %270 : vector<1x128xi1>, vector<1x128xf32>
    %272 = math.exp %271 : vector<1x128xf32>
    %273 = vector.broadcast %9 : f32 to vector<1x128xf32>
    %274 = arith.mulf %243, %273 : vector<1x128xf32>
    %cst_71 = arith.constant 0.000000e+00 : f32
    %275 = vector.broadcast %cst_71 : f32 to vector<1x128xf32>
    %276 = arith.select %258, %274, %275 : vector<1x128xi1>, vector<1x128xf32>
    %277 = math.exp %276 : vector<1x128xf32>
    %cst_72 = arith.constant 1.100000e+01 : f32
    %278 = vector.broadcast %cst_72 : f32 to vector<1x128xf32>
    %279 = arith.subf %278, %256 : vector<1x128xf32>
    %280 = vector.broadcast %14 : f32 to vector<1x128xf32>
    %281 = arith.mulf %280, %279 : vector<1x128xf32>
    %282 = arith.mulf %281, %272 : vector<1x128xf32>
    %cst_73 = arith.constant 1.000000e+00 : f32
    %283 = vector.broadcast %cst_73 : f32 to vector<1x128xf32>
    %284 = arith.subf %277, %283 : vector<1x128xf32>
    %285 = arith.mulf %282, %284 : vector<1x128xf32>
    %cst_74 = arith.constant 1.000000e+00 : f32
    %286 = vector.broadcast %cst_74 : f32 to vector<1x128xf32>
    %287 = arith.addf %286, %285 : vector<1x128xf32>
    %288 = arith.mulf %201, %287 : vector<1x128xf32>
    %289 = vector.broadcast %10 : f32 to vector<1x128xf32>
    %290 = arith.mulf %289, %272 : vector<1x128xf32>
    %291 = arith.select %258, %288, %290 : vector<1x128xi1>, vector<1x128xf32>
    %c0_i32_75 = arith.constant 0 : i32
    %292 = arith.cmpi eq, %c2_i32, %c0_i32_75 : i32
    %293 = arith.andi %0, %292 : i1
    %294 = arith.select %293, %226, %291 : vector<1x128xf32>
    %cst_76 = arith.constant 1.000000e-01 : f32
    %cst_77 = arith.constant 3.650000e+04 : f32
    %295 = vector.broadcast %cst_76 : f32 to vector<1x128xf32>
    %296 = arith.maximumf %295, %294 : vector<1x128xf32>
    %297 = vector.broadcast %cst_77 : f32 to vector<1x128xf32>
    %298 = arith.minimumf %297, %296 : vector<1x128xf32>
    %299 = arith.select %293, %232, %256 : vector<1x128xf32>
    %cst_78 = arith.constant 1.000000e+00 : f32
    %cst_79 = arith.constant 1.000000e+01 : f32
    %300 = vector.broadcast %cst_78 : f32 to vector<1x128xf32>
    %301 = arith.maximumf %300, %299 : vector<1x128xf32>
    %302 = vector.broadcast %cst_79 : f32 to vector<1x128xf32>
    %303 = arith.minimumf %302, %301 : vector<1x128xf32>
    %304 = arith.index_cast %c2_i32 : i32 to index
    %c0_80 = arith.constant 0 : index
    %c0_81 = arith.constant 0 : index
    %305 = vector.load %arg5[%304, %c0_80, %c0_81] : memref<8x1x128xf32, #tpu.memory_space<vmem>>, vector<1x1x128xf32>
    %306 = vector.shape_cast %305 : vector<1x1x128xf32> to vector<1x128xf32>
    %307 = vector.shape_cast %298 : vector<1x128xf32> to vector<1x1x128xf32>
    tpu.vector_store %arg5[%304, %c0_80, %c0_81], %307 {strides = array<i32>} : memref<8x1x128xf32, #tpu.memory_space<vmem>>, vector<1x1x128xf32>,
    %308 = arith.index_cast %c2_i32 : i32 to index
    %c0_82 = arith.constant 0 : index
    %c0_83 = arith.constant 0 : index
    %309 = vector.load %arg6[%308, %c0_82, %c0_83] : memref<8x1x128xf32, #tpu.memory_space<vmem>>, vector<1x1x128xf32>
    %310 = vector.shape_cast %309 : vector<1x1x128xf32> to vector<1x128xf32>
    %311 = vector.shape_cast %303 : vector<1x128xf32> to vector<1x1x128xf32>
    tpu.vector_store %arg6[%308, %c0_82, %c0_83], %311 {strides = array<i32>} : memref<8x1x128xf32, #tpu.memory_space<vmem>>, vector<1x1x128xf32>,
    %c3_i32 = arith.constant 3 : i32
    %312 = arith.index_cast %c3_i32 : i32 to index
    %c0_84 = arith.constant 0 : index
    %c0_85 = arith.constant 0 : index
    %313 = vector.load %arg3[%312, %c0_84, %c0_85] : memref<8x1x128xf32, #tpu.memory_space<vmem>>, vector<1x1x128xf32>
    %314 = vector.shape_cast %313 : vector<1x1x128xf32> to vector<1x128xf32>
    %315 = arith.index_cast %c3_i32 : i32 to index
    %c0_86 = arith.constant 0 : index
    %c0_87 = arith.constant 0 : index
    %316 = vector.load %arg4[%315, %c0_86, %c0_87] : memref<8x1x128xf32, #tpu.memory_space<vmem>>, vector<1x1x128xf32>
    %317 = vector.shape_cast %316 : vector<1x1x128xf32> to vector<1x128xf32>
    %cst_88 = arith.constant 1.000000e+00 : f32
    %318 = vector.broadcast %cst_88 : f32 to vector<1x128xf32>
    %319 = arith.subf %317, %318 : vector<1x128xf32>
    %320 = vector.broadcast %2 : f32 to vector<1x128xf32>
    %321 = arith.mulf %320, %319 : vector<1x128xf32>
    %322 = vector.broadcast %1 : f32 to vector<1x128xf32>
    %323 = arith.addf %322, %321 : vector<1x128xf32>
    %cst_89 = arith.constant 3.000000e+00 : f32
    %324 = vector.broadcast %cst_89 : f32 to vector<1x128xf32>
    %325 = arith.subf %317, %324 : vector<1x128xf32>
    %326 = vector.broadcast %4 : f32 to vector<1x128xf32>
    %327 = arith.mulf %326, %325 : vector<1x128xf32>
    %328 = vector.broadcast %3 : f32 to vector<1x128xf32>
    %329 = arith.addf %328, %327 : vector<1x128xf32>
    %330 = tpu.reciprocal %298 {approx = true} : vector<1x128xf32> -> vector<1x128xf32>
    %331 = arith.mulf %298, %330 : vector<1x128xf32>
    %cst_90 = arith.constant 2.000000e+00 : f32
    %332 = vector.broadcast %cst_90 : f32 to vector<1x128xf32>
    %333 = arith.subf %332, %331 : vector<1x128xf32>
    %334 = arith.mulf %330, %333 : vector<1x128xf32>
    %cst_91 = arith.constant -0.105360515 : f32
    %335 = vector.broadcast %cst_91 : f32 to vector<1x128xf32>
    %336 = arith.mulf %335, %314 : vector<1x128xf32>
    %337 = arith.mulf %336, %334 : vector<1x128xf32>
    %338 = math.exp %337 : vector<1x128xf32>
    %cst_92 = arith.constant 1.000000e+00 : f32
    %339 = vector.broadcast %cst_92 : f32 to vector<1x128xf32>
    %340 = arith.subf %339, %338 : vector<1x128xf32>
    %cst_93 = arith.constant 3.000000e+00 : f32
    %341 = vector.broadcast %cst_93 : f32 to vector<1x128xf32>
    %342 = arith.subf %317, %341 : vector<1x128xf32>
    %343 = vector.broadcast %5 : f32 to vector<1x128xf32>
    %344 = arith.mulf %343, %342 : vector<1x128xf32>
    %345 = arith.addf %303, %344 : vector<1x128xf32>
    %346 = vector.broadcast %16 : f32 to vector<1x128xf32>
    %347 = arith.mulf %346, %345 : vector<1x128xf32>
    %348 = vector.broadcast %15 : f32 to vector<1x128xf32>
    %349 = arith.addf %348, %347 : vector<1x128xf32>
    %cst_94 = arith.constant 1.000000e+00 : f32
    %cst_95 = arith.constant 1.000000e+01 : f32
    %350 = vector.broadcast %cst_94 : f32 to vector<1x128xf32>
    %351 = arith.maximumf %350, %349 : vector<1x128xf32>
    %352 = vector.broadcast %cst_95 : f32 to vector<1x128xf32>
    %353 = arith.minimumf %352, %351 : vector<1x128xf32>
    %cst_96 = arith.constant 1.000000e+00 : f32
    %354 = vector.broadcast %cst_96 : f32 to vector<1x128xf32>
    %355 = arith.cmpf ogt, %317, %354 : vector<1x128xf32>
    %356 = math.log %298 : vector<1x128xf32>
    %357 = math.log %353 : vector<1x128xf32>
    %358 = vector.broadcast %8 : f32 to vector<1x128xf32>
    %359 = arith.mulf %358, %356 : vector<1x128xf32>
    %360 = vector.broadcast %11 : f32 to vector<1x128xf32>
    %361 = arith.mulf %360, %357 : vector<1x128xf32>
    %362 = vector.broadcast %12 : f32 to vector<1x128xf32>
    %363 = arith.mulf %362, %356 : vector<1x128xf32>
    %364 = arith.addf %361, %363 : vector<1x128xf32>
    %365 = vector.broadcast %13 : f32 to vector<1x128xf32>
    %366 = arith.mulf %340, %365 : vector<1x128xf32>
    %367 = arith.addf %364, %366 : vector<1x128xf32>
    %368 = arith.select %355, %359, %367 : vector<1x128xi1>, vector<1x128xf32>
    %369 = math.exp %368 : vector<1x128xf32>
    %370 = vector.broadcast %9 : f32 to vector<1x128xf32>
    %371 = arith.mulf %340, %370 : vector<1x128xf32>
    %cst_97 = arith.constant 0.000000e+00 : f32
    %372 = vector.broadcast %cst_97 : f32 to vector<1x128xf32>
    %373 = arith.select %355, %371, %372 : vector<1x128xi1>, vector<1x128xf32>
    %374 = math.exp %373 : vector<1x128xf32>
    %cst_98 = arith.constant 1.100000e+01 : f32
    %375 = vector.broadcast %cst_98 : f32 to vector<1x128xf32>
    %376 = arith.subf %375, %353 : vector<1x128xf32>
    %377 = vector.broadcast %14 : f32 to vector<1x128xf32>
    %378 = arith.mulf %377, %376 : vector<1x128xf32>
    %379 = arith.mulf %378, %369 : vector<1x128xf32>
    %cst_99 = arith.constant 1.000000e+00 : f32
    %380 = vector.broadcast %cst_99 : f32 to vector<1x128xf32>
    %381 = arith.subf %374, %380 : vector<1x128xf32>
    %382 = arith.mulf %379, %381 : vector<1x128xf32>
    %cst_100 = arith.constant 1.000000e+00 : f32
    %383 = vector.broadcast %cst_100 : f32 to vector<1x128xf32>
    %384 = arith.addf %383, %382 : vector<1x128xf32>
    %385 = arith.mulf %298, %384 : vector<1x128xf32>
    %386 = vector.broadcast %10 : f32 to vector<1x128xf32>
    %387 = arith.mulf %386, %369 : vector<1x128xf32>
    %388 = arith.select %355, %385, %387 : vector<1x128xi1>, vector<1x128xf32>
    %c0_i32_101 = arith.constant 0 : i32
    %389 = arith.cmpi eq, %c3_i32, %c0_i32_101 : i32
    %390 = arith.andi %0, %389 : i1
    %391 = arith.select %390, %323, %388 : vector<1x128xf32>
    %cst_102 = arith.constant 1.000000e-01 : f32
    %cst_103 = arith.constant 3.650000e+04 : f32
    %392 = vector.broadcast %cst_102 : f32 to vector<1x128xf32>
    %393 = arith.maximumf %392, %391 : vector<1x128xf32>
    %394 = vector.broadcast %cst_103 : f32 to vector<1x128xf32>
    %395 = arith.minimumf %394, %393 : vector<1x128xf32>
    %396 = arith.select %390, %329, %353 : vector<1x128xf32>
    %cst_104 = arith.constant 1.000000e+00 : f32
    %cst_105 = arith.constant 1.000000e+01 : f32
    %397 = vector.broadcast %cst_104 : f32 to vector<1x128xf32>
    %398 = arith.maximumf %397, %396 : vector<1x128xf32>
    %399 = vector.broadcast %cst_105 : f32 to vector<1x128xf32>
    %400 = arith.minimumf %399, %398 : vector<1x128xf32>
    %401 = arith.index_cast %c3_i32 : i32 to index
    %c0_106 = arith.constant 0 : index
    %c0_107 = arith.constant 0 : index
    %402 = vector.load %arg5[%401, %c0_106, %c0_107] : memref<8x1x128xf32, #tpu.memory_space<vmem>>, vector<1x1x128xf32>
    %403 = vector.shape_cast %402 : vector<1x1x128xf32> to vector<1x128xf32>
    %404 = vector.shape_cast %395 : vector<1x128xf32> to vector<1x1x128xf32>
    tpu.vector_store %arg5[%401, %c0_106, %c0_107], %404 {strides = array<i32>} : memref<8x1x128xf32, #tpu.memory_space<vmem>>, vector<1x1x128xf32>,
    %405 = arith.index_cast %c3_i32 : i32 to index
    %c0_108 = arith.constant 0 : index
    %c0_109 = arith.constant 0 : index
    %406 = vector.load %arg6[%405, %c0_108, %c0_109] : memref<8x1x128xf32, #tpu.memory_space<vmem>>, vector<1x1x128xf32>
    %407 = vector.shape_cast %406 : vector<1x1x128xf32> to vector<1x128xf32>
    %408 = vector.shape_cast %400 : vector<1x128xf32> to vector<1x1x128xf32>
    tpu.vector_store %arg6[%405, %c0_108, %c0_109], %408 {strides = array<i32>} : memref<8x1x128xf32, #tpu.memory_space<vmem>>, vector<1x1x128xf32>,
    %c4_i32 = arith.constant 4 : i32
    %409 = arith.index_cast %c4_i32 : i32 to index
    %c0_110 = arith.constant 0 : index
    %c0_111 = arith.constant 0 : index
    %410 = vector.load %arg3[%409, %c0_110, %c0_111] : memref<8x1x128xf32, #tpu.memory_space<vmem>>, vector<1x1x128xf32>
    %411 = vector.shape_cast %410 : vector<1x1x128xf32> to vector<1x128xf32>
    %412 = arith.index_cast %c4_i32 : i32 to index
    %c0_112 = arith.constant 0 : index
    %c0_113 = arith.constant 0 : index
    %413 = vector.load %arg4[%412, %c0_112, %c0_113] : memref<8x1x128xf32, #tpu.memory_space<vmem>>, vector<1x1x128xf32>
    %414 = vector.shape_cast %413 : vector<1x1x128xf32> to vector<1x128xf32>
    %cst_114 = arith.constant 1.000000e+00 : f32
    %415 = vector.broadcast %cst_114 : f32 to vector<1x128xf32>
    %416 = arith.subf %414, %415 : vector<1x128xf32>
    %417 = vector.broadcast %2 : f32 to vector<1x128xf32>
    %418 = arith.mulf %417, %416 : vector<1x128xf32>
    %419 = vector.broadcast %1 : f32 to vector<1x128xf32>
    %420 = arith.addf %419, %418 : vector<1x128xf32>
    %cst_115 = arith.constant 3.000000e+00 : f32
    %421 = vector.broadcast %cst_115 : f32 to vector<1x128xf32>
    %422 = arith.subf %414, %421 : vector<1x128xf32>
    %423 = vector.broadcast %4 : f32 to vector<1x128xf32>
    %424 = arith.mulf %423, %422 : vector<1x128xf32>
    %425 = vector.broadcast %3 : f32 to vector<1x128xf32>
    %426 = arith.addf %425, %424 : vector<1x128xf32>
    %427 = tpu.reciprocal %395 {approx = true} : vector<1x128xf32> -> vector<1x128xf32>
    %428 = arith.mulf %395, %427 : vector<1x128xf32>
    %cst_116 = arith.constant 2.000000e+00 : f32
    %429 = vector.broadcast %cst_116 : f32 to vector<1x128xf32>
    %430 = arith.subf %429, %428 : vector<1x128xf32>
    %431 = arith.mulf %427, %430 : vector<1x128xf32>
    %cst_117 = arith.constant -0.105360515 : f32
    %432 = vector.broadcast %cst_117 : f32 to vector<1x128xf32>
    %433 = arith.mulf %432, %411 : vector<1x128xf32>
    %434 = arith.mulf %433, %431 : vector<1x128xf32>
    %435 = math.exp %434 : vector<1x128xf32>
    %cst_118 = arith.constant 1.000000e+00 : f32
    %436 = vector.broadcast %cst_118 : f32 to vector<1x128xf32>
    %437 = arith.subf %436, %435 : vector<1x128xf32>
    %cst_119 = arith.constant 3.000000e+00 : f32
    %438 = vector.broadcast %cst_119 : f32 to vector<1x128xf32>
    %439 = arith.subf %414, %438 : vector<1x128xf32>
    %440 = vector.broadcast %5 : f32 to vector<1x128xf32>
    %441 = arith.mulf %440, %439 : vector<1x128xf32>
    %442 = arith.addf %400, %441 : vector<1x128xf32>
    %443 = vector.broadcast %16 : f32 to vector<1x128xf32>
    %444 = arith.mulf %443, %442 : vector<1x128xf32>
    %445 = vector.broadcast %15 : f32 to vector<1x128xf32>
    %446 = arith.addf %445, %444 : vector<1x128xf32>
    %cst_120 = arith.constant 1.000000e+00 : f32
    %cst_121 = arith.constant 1.000000e+01 : f32
    %447 = vector.broadcast %cst_120 : f32 to vector<1x128xf32>
    %448 = arith.maximumf %447, %446 : vector<1x128xf32>
    %449 = vector.broadcast %cst_121 : f32 to vector<1x128xf32>
    %450 = arith.minimumf %449, %448 : vector<1x128xf32>
    %cst_122 = arith.constant 1.000000e+00 : f32
    %451 = vector.broadcast %cst_122 : f32 to vector<1x128xf32>
    %452 = arith.cmpf ogt, %414, %451 : vector<1x128xf32>
    %453 = math.log %395 : vector<1x128xf32>
    %454 = math.log %450 : vector<1x128xf32>
    %455 = vector.broadcast %8 : f32 to vector<1x128xf32>
    %456 = arith.mulf %455, %453 : vector<1x128xf32>
    %457 = vector.broadcast %11 : f32 to vector<1x128xf32>
    %458 = arith.mulf %457, %454 : vector<1x128xf32>
    %459 = vector.broadcast %12 : f32 to vector<1x128xf32>
    %460 = arith.mulf %459, %453 : vector<1x128xf32>
    %461 = arith.addf %458, %460 : vector<1x128xf32>
    %462 = vector.broadcast %13 : f32 to vector<1x128xf32>
    %463 = arith.mulf %437, %462 : vector<1x128xf32>
    %464 = arith.addf %461, %463 : vector<1x128xf32>
    %465 = arith.select %452, %456, %464 : vector<1x128xi1>, vector<1x128xf32>
    %466 = math.exp %465 : vector<1x128xf32>
    %467 = vector.broadcast %9 : f32 to vector<1x128xf32>
    %468 = arith.mulf %437, %467 : vector<1x128xf32>
    %cst_123 = arith.constant 0.000000e+00 : f32
    %469 = vector.broadcast %cst_123 : f32 to vector<1x128xf32>
    %470 = arith.select %452, %468, %469 : vector<1x128xi1>, vector<1x128xf32>
    %471 = math.exp %470 : vector<1x128xf32>
    %cst_124 = arith.constant 1.100000e+01 : f32
    %472 = vector.broadcast %cst_124 : f32 to vector<1x128xf32>
    %473 = arith.subf %472, %450 : vector<1x128xf32>
    %474 = vector.broadcast %14 : f32 to vector<1x128xf32>
    %475 = arith.mulf %474, %473 : vector<1x128xf32>
    %476 = arith.mulf %475, %466 : vector<1x128xf32>
    %cst_125 = arith.constant 1.000000e+00 : f32
    %477 = vector.broadcast %cst_125 : f32 to vector<1x128xf32>
    %478 = arith.subf %471, %477 : vector<1x128xf32>
    %479 = arith.mulf %476, %478 : vector<1x128xf32>
    %cst_126 = arith.constant 1.000000e+00 : f32
    %480 = vector.broadcast %cst_126 : f32 to vector<1x128xf32>
    %481 = arith.addf %480, %479 : vector<1x128xf32>
    %482 = arith.mulf %395, %481 : vector<1x128xf32>
    %483 = vector.broadcast %10 : f32 to vector<1x128xf32>
    %484 = arith.mulf %483, %466 : vector<1x128xf32>
    %485 = arith.select %452, %482, %484 : vector<1x128xi1>, vector<1x128xf32>
    %c0_i32_127 = arith.constant 0 : i32
    %486 = arith.cmpi eq, %c4_i32, %c0_i32_127 : i32
    %487 = arith.andi %0, %486 : i1
    %488 = arith.select %487, %420, %485 : vector<1x128xf32>
    %cst_128 = arith.constant 1.000000e-01 : f32
    %cst_129 = arith.constant 3.650000e+04 : f32
    %489 = vector.broadcast %cst_128 : f32 to vector<1x128xf32>
    %490 = arith.maximumf %489, %488 : vector<1x128xf32>
    %491 = vector.broadcast %cst_129 : f32 to vector<1x128xf32>
    %492 = arith.minimumf %491, %490 : vector<1x128xf32>
    %493 = arith.select %487, %426, %450 : vector<1x128xf32>
    %cst_130 = arith.constant 1.000000e+00 : f32
    %cst_131 = arith.constant 1.000000e+01 : f32
    %494 = vector.broadcast %cst_130 : f32 to vector<1x128xf32>
    %495 = arith.maximumf %494, %493 : vector<1x128xf32>
    %496 = vector.broadcast %cst_131 : f32 to vector<1x128xf32>
    %497 = arith.minimumf %496, %495 : vector<1x128xf32>
    %498 = arith.index_cast %c4_i32 : i32 to index
    %c0_132 = arith.constant 0 : index
    %c0_133 = arith.constant 0 : index
    %499 = vector.load %arg5[%498, %c0_132, %c0_133] : memref<8x1x128xf32, #tpu.memory_space<vmem>>, vector<1x1x128xf32>
    %500 = vector.shape_cast %499 : vector<1x1x128xf32> to vector<1x128xf32>
    %501 = vector.shape_cast %492 : vector<1x128xf32> to vector<1x1x128xf32>
    tpu.vector_store %arg5[%498, %c0_132, %c0_133], %501 {strides = array<i32>} : memref<8x1x128xf32, #tpu.memory_space<vmem>>, vector<1x1x128xf32>,
    %502 = arith.index_cast %c4_i32 : i32 to index
    %c0_134 = arith.constant 0 : index
    %c0_135 = arith.constant 0 : index
    %503 = vector.load %arg6[%502, %c0_134, %c0_135] : memref<8x1x128xf32, #tpu.memory_space<vmem>>, vector<1x1x128xf32>
    %504 = vector.shape_cast %503 : vector<1x1x128xf32> to vector<1x128xf32>
    %505 = vector.shape_cast %497 : vector<1x128xf32> to vector<1x1x128xf32>
    tpu.vector_store %arg6[%502, %c0_134, %c0_135], %505 {strides = array<i32>} : memref<8x1x128xf32, #tpu.memory_space<vmem>>, vector<1x1x128xf32>,
    %c5_i32 = arith.constant 5 : i32
    %506 = arith.index_cast %c5_i32 : i32 to index
    %c0_136 = arith.constant 0 : index
    %c0_137 = arith.constant 0 : index
    %507 = vector.load %arg3[%506, %c0_136, %c0_137] : memref<8x1x128xf32, #tpu.memory_space<vmem>>, vector<1x1x128xf32>
    %508 = vector.shape_cast %507 : vector<1x1x128xf32> to vector<1x128xf32>
    %509 = arith.index_cast %c5_i32 : i32 to index
    %c0_138 = arith.constant 0 : index
    %c0_139 = arith.constant 0 : index
    %510 = vector.load %arg4[%509, %c0_138, %c0_139] : memref<8x1x128xf32, #tpu.memory_space<vmem>>, vector<1x1x128xf32>
    %511 = vector.shape_cast %510 : vector<1x1x128xf32> to vector<1x128xf32>
    %cst_140 = arith.constant 1.000000e+00 : f32
    %512 = vector.broadcast %cst_140 : f32 to vector<1x128xf32>
    %513 = arith.subf %511, %512 : vector<1x128xf32>
    %514 = vector.broadcast %2 : f32 to vector<1x128xf32>
    %515 = arith.mulf %514, %513 : vector<1x128xf32>
    %516 = vector.broadcast %1 : f32 to vector<1x128xf32>
    %517 = arith.addf %516, %515 : vector<1x128xf32>
    %cst_141 = arith.constant 3.000000e+00 : f32
    %518 = vector.broadcast %cst_141 : f32 to vector<1x128xf32>
    %519 = arith.subf %511, %518 : vector<1x128xf32>
    %520 = vector.broadcast %4 : f32 to vector<1x128xf32>
    %521 = arith.mulf %520, %519 : vector<1x128xf32>
    %522 = vector.broadcast %3 : f32 to vector<1x128xf32>
    %523 = arith.addf %522, %521 : vector<1x128xf32>
    %524 = tpu.reciprocal %492 {approx = true} : vector<1x128xf32> -> vector<1x128xf32>
    %525 = arith.mulf %492, %524 : vector<1x128xf32>
    %cst_142 = arith.constant 2.000000e+00 : f32
    %526 = vector.broadcast %cst_142 : f32 to vector<1x128xf32>
    %527 = arith.subf %526, %525 : vector<1x128xf32>
    %528 = arith.mulf %524, %527 : vector<1x128xf32>
    %cst_143 = arith.constant -0.105360515 : f32
    %529 = vector.broadcast %cst_143 : f32 to vector<1x128xf32>
    %530 = arith.mulf %529, %508 : vector<1x128xf32>
    %531 = arith.mulf %530, %528 : vector<1x128xf32>
    %532 = math.exp %531 : vector<1x128xf32>
    %cst_144 = arith.constant 1.000000e+00 : f32
    %533 = vector.broadcast %cst_144 : f32 to vector<1x128xf32>
    %534 = arith.subf %533, %532 : vector<1x128xf32>
    %cst_145 = arith.constant 3.000000e+00 : f32
    %535 = vector.broadcast %cst_145 : f32 to vector<1x128xf32>
    %536 = arith.subf %511, %535 : vector<1x128xf32>
    %537 = vector.broadcast %5 : f32 to vector<1x128xf32>
    %538 = arith.mulf %537, %536 : vector<1x128xf32>
    %539 = arith.addf %497, %538 : vector<1x128xf32>
    %540 = vector.broadcast %16 : f32 to vector<1x128xf32>
    %541 = arith.mulf %540, %539 : vector<1x128xf32>
    %542 = vector.broadcast %15 : f32 to vector<1x128xf32>
    %543 = arith.addf %542, %541 : vector<1x128xf32>
    %cst_146 = arith.constant 1.000000e+00 : f32
    %cst_147 = arith.constant 1.000000e+01 : f32
    %544 = vector.broadcast %cst_146 : f32 to vector<1x128xf32>
    %545 = arith.maximumf %544, %543 : vector<1x128xf32>
    %546 = vector.broadcast %cst_147 : f32 to vector<1x128xf32>
    %547 = arith.minimumf %546, %545 : vector<1x128xf32>
    %cst_148 = arith.constant 1.000000e+00 : f32
    %548 = vector.broadcast %cst_148 : f32 to vector<1x128xf32>
    %549 = arith.cmpf ogt, %511, %548 : vector<1x128xf32>
    %550 = math.log %492 : vector<1x128xf32>
    %551 = math.log %547 : vector<1x128xf32>
    %552 = vector.broadcast %8 : f32 to vector<1x128xf32>
    %553 = arith.mulf %552, %550 : vector<1x128xf32>
    %554 = vector.broadcast %11 : f32 to vector<1x128xf32>
    %555 = arith.mulf %554, %551 : vector<1x128xf32>
    %556 = vector.broadcast %12 : f32 to vector<1x128xf32>
    %557 = arith.mulf %556, %550 : vector<1x128xf32>
    %558 = arith.addf %555, %557 : vector<1x128xf32>
    %559 = vector.broadcast %13 : f32 to vector<1x128xf32>
    %560 = arith.mulf %534, %559 : vector<1x128xf32>
    %561 = arith.addf %558, %560 : vector<1x128xf32>
    %562 = arith.select %549, %553, %561 : vector<1x128xi1>, vector<1x128xf32>
    %563 = math.exp %562 : vector<1x128xf32>
    %564 = vector.broadcast %9 : f32 to vector<1x128xf32>
    %565 = arith.mulf %534, %564 : vector<1x128xf32>
    %cst_149 = arith.constant 0.000000e+00 : f32
    %566 = vector.broadcast %cst_149 : f32 to vector<1x128xf32>
    %567 = arith.select %549, %565, %566 : vector<1x128xi1>, vector<1x128xf32>
    %568 = math.exp %567 : vector<1x128xf32>
    %cst_150 = arith.constant 1.100000e+01 : f32
    %569 = vector.broadcast %cst_150 : f32 to vector<1x128xf32>
    %570 = arith.subf %569, %547 : vector<1x128xf32>
    %571 = vector.broadcast %14 : f32 to vector<1x128xf32>
    %572 = arith.mulf %571, %570 : vector<1x128xf32>
    %573 = arith.mulf %572, %563 : vector<1x128xf32>
    %cst_151 = arith.constant 1.000000e+00 : f32
    %574 = vector.broadcast %cst_151 : f32 to vector<1x128xf32>
    %575 = arith.subf %568, %574 : vector<1x128xf32>
    %576 = arith.mulf %573, %575 : vector<1x128xf32>
    %cst_152 = arith.constant 1.000000e+00 : f32
    %577 = vector.broadcast %cst_152 : f32 to vector<1x128xf32>
    %578 = arith.addf %577, %576 : vector<1x128xf32>
    %579 = arith.mulf %492, %578 : vector<1x128xf32>
    %580 = vector.broadcast %10 : f32 to vector<1x128xf32>
    %581 = arith.mulf %580, %563 : vector<1x128xf32>
    %582 = arith.select %549, %579, %581 : vector<1x128xi1>, vector<1x128xf32>
    %c0_i32_153 = arith.constant 0 : i32
    %583 = arith.cmpi eq, %c5_i32, %c0_i32_153 : i32
    %584 = arith.andi %0, %583 : i1
    %585 = arith.select %584, %517, %582 : vector<1x128xf32>
    %cst_154 = arith.constant 1.000000e-01 : f32
    %cst_155 = arith.constant 3.650000e+04 : f32
    %586 = vector.broadcast %cst_154 : f32 to vector<1x128xf32>
    %587 = arith.maximumf %586, %585 : vector<1x128xf32>
    %588 = vector.broadcast %cst_155 : f32 to vector<1x128xf32>
    %589 = arith.minimumf %588, %587 : vector<1x128xf32>
    %590 = arith.select %584, %523, %547 : vector<1x128xf32>
    %cst_156 = arith.constant 1.000000e+00 : f32
    %cst_157 = arith.constant 1.000000e+01 : f32
    %591 = vector.broadcast %cst_156 : f32 to vector<1x128xf32>
    %592 = arith.maximumf %591, %590 : vector<1x128xf32>
    %593 = vector.broadcast %cst_157 : f32 to vector<1x128xf32>
    %594 = arith.minimumf %593, %592 : vector<1x128xf32>
    %595 = arith.index_cast %c5_i32 : i32 to index
    %c0_158 = arith.constant 0 : index
    %c0_159 = arith.constant 0 : index
    %596 = vector.load %arg5[%595, %c0_158, %c0_159] : memref<8x1x128xf32, #tpu.memory_space<vmem>>, vector<1x1x128xf32>
    %597 = vector.shape_cast %596 : vector<1x1x128xf32> to vector<1x128xf32>
    %598 = vector.shape_cast %589 : vector<1x128xf32> to vector<1x1x128xf32>
    tpu.vector_store %arg5[%595, %c0_158, %c0_159], %598 {strides = array<i32>} : memref<8x1x128xf32, #tpu.memory_space<vmem>>, vector<1x1x128xf32>,
    %599 = arith.index_cast %c5_i32 : i32 to index
    %c0_160 = arith.constant 0 : index
    %c0_161 = arith.constant 0 : index
    %600 = vector.load %arg6[%599, %c0_160, %c0_161] : memref<8x1x128xf32, #tpu.memory_space<vmem>>, vector<1x1x128xf32>
    %601 = vector.shape_cast %600 : vector<1x1x128xf32> to vector<1x128xf32>
    %602 = vector.shape_cast %594 : vector<1x128xf32> to vector<1x1x128xf32>
    tpu.vector_store %arg6[%599, %c0_160, %c0_161], %602 {strides = array<i32>} : memref<8x1x128xf32, #tpu.memory_space<vmem>>, vector<1x1x128xf32>,
    %c6_i32 = arith.constant 6 : i32
    %603 = arith.index_cast %c6_i32 : i32 to index
    %c0_162 = arith.constant 0 : index
    %c0_163 = arith.constant 0 : index
    %604 = vector.load %arg3[%603, %c0_162, %c0_163] : memref<8x1x128xf32, #tpu.memory_space<vmem>>, vector<1x1x128xf32>
    %605 = vector.shape_cast %604 : vector<1x1x128xf32> to vector<1x128xf32>
    %606 = arith.index_cast %c6_i32 : i32 to index
    %c0_164 = arith.constant 0 : index
    %c0_165 = arith.constant 0 : index
    %607 = vector.load %arg4[%606, %c0_164, %c0_165] : memref<8x1x128xf32, #tpu.memory_space<vmem>>, vector<1x1x128xf32>
    %608 = vector.shape_cast %607 : vector<1x1x128xf32> to vector<1x128xf32>
    %cst_166 = arith.constant 1.000000e+00 : f32
    %609 = vector.broadcast %cst_166 : f32 to vector<1x128xf32>
    %610 = arith.subf %608, %609 : vector<1x128xf32>
    %611 = vector.broadcast %2 : f32 to vector<1x128xf32>
    %612 = arith.mulf %611, %610 : vector<1x128xf32>
    %613 = vector.broadcast %1 : f32 to vector<1x128xf32>
    %614 = arith.addf %613, %612 : vector<1x128xf32>
    %cst_167 = arith.constant 3.000000e+00 : f32
    %615 = vector.broadcast %cst_167 : f32 to vector<1x128xf32>
    %616 = arith.subf %608, %615 : vector<1x128xf32>
    %617 = vector.broadcast %4 : f32 to vector<1x128xf32>
    %618 = arith.mulf %617, %616 : vector<1x128xf32>
    %619 = vector.broadcast %3 : f32 to vector<1x128xf32>
    %620 = arith.addf %619, %618 : vector<1x128xf32>
    %621 = tpu.reciprocal %589 {approx = true} : vector<1x128xf32> -> vector<1x128xf32>
    %622 = arith.mulf %589, %621 : vector<1x128xf32>
    %cst_168 = arith.constant 2.000000e+00 : f32
    %623 = vector.broadcast %cst_168 : f32 to vector<1x128xf32>
    %624 = arith.subf %623, %622 : vector<1x128xf32>
    %625 = arith.mulf %621, %624 : vector<1x128xf32>
    %cst_169 = arith.constant -0.105360515 : f32
    %626 = vector.broadcast %cst_169 : f32 to vector<1x128xf32>
    %627 = arith.mulf %626, %605 : vector<1x128xf32>
    %628 = arith.mulf %627, %625 : vector<1x128xf32>
    %629 = math.exp %628 : vector<1x128xf32>
    %cst_170 = arith.constant 1.000000e+00 : f32
    %630 = vector.broadcast %cst_170 : f32 to vector<1x128xf32>
    %631 = arith.subf %630, %629 : vector<1x128xf32>
    %cst_171 = arith.constant 3.000000e+00 : f32
    %632 = vector.broadcast %cst_171 : f32 to vector<1x128xf32>
    %633 = arith.subf %608, %632 : vector<1x128xf32>
    %634 = vector.broadcast %5 : f32 to vector<1x128xf32>
    %635 = arith.mulf %634, %633 : vector<1x128xf32>
    %636 = arith.addf %594, %635 : vector<1x128xf32>
    %637 = vector.broadcast %16 : f32 to vector<1x128xf32>
    %638 = arith.mulf %637, %636 : vector<1x128xf32>
    %639 = vector.broadcast %15 : f32 to vector<1x128xf32>
    %640 = arith.addf %639, %638 : vector<1x128xf32>
    %cst_172 = arith.constant 1.000000e+00 : f32
    %cst_173 = arith.constant 1.000000e+01 : f32
    %641 = vector.broadcast %cst_172 : f32 to vector<1x128xf32>
    %642 = arith.maximumf %641, %640 : vector<1x128xf32>
    %643 = vector.broadcast %cst_173 : f32 to vector<1x128xf32>
    %644 = arith.minimumf %643, %642 : vector<1x128xf32>
    %cst_174 = arith.constant 1.000000e+00 : f32
    %645 = vector.broadcast %cst_174 : f32 to vector<1x128xf32>
    %646 = arith.cmpf ogt, %608, %645 : vector<1x128xf32>
    %647 = math.log %589 : vector<1x128xf32>
    %648 = math.log %644 : vector<1x128xf32>
    %649 = vector.broadcast %8 : f32 to vector<1x128xf32>
    %650 = arith.mulf %649, %647 : vector<1x128xf32>
    %651 = vector.broadcast %11 : f32 to vector<1x128xf32>
    %652 = arith.mulf %651, %648 : vector<1x128xf32>
    %653 = vector.broadcast %12 : f32 to vector<1x128xf32>
    %654 = arith.mulf %653, %647 : vector<1x128xf32>
    %655 = arith.addf %652, %654 : vector<1x128xf32>
    %656 = vector.broadcast %13 : f32 to vector<1x128xf32>
    %657 = arith.mulf %631, %656 : vector<1x128xf32>
    %658 = arith.addf %655, %657 : vector<1x128xf32>
    %659 = arith.select %646, %650, %658 : vector<1x128xi1>, vector<1x128xf32>
    %660 = math.exp %659 : vector<1x128xf32>
    %661 = vector.broadcast %9 : f32 to vector<1x128xf32>
    %662 = arith.mulf %631, %661 : vector<1x128xf32>
    %cst_175 = arith.constant 0.000000e+00 : f32
    %663 = vector.broadcast %cst_175 : f32 to vector<1x128xf32>
    %664 = arith.select %646, %662, %663 : vector<1x128xi1>, vector<1x128xf32>
    %665 = math.exp %664 : vector<1x128xf32>
    %cst_176 = arith.constant 1.100000e+01 : f32
    %666 = vector.broadcast %cst_176 : f32 to vector<1x128xf32>
    %667 = arith.subf %666, %644 : vector<1x128xf32>
    %668 = vector.broadcast %14 : f32 to vector<1x128xf32>
    %669 = arith.mulf %668, %667 : vector<1x128xf32>
    %670 = arith.mulf %669, %660 : vector<1x128xf32>
    %cst_177 = arith.constant 1.000000e+00 : f32
    %671 = vector.broadcast %cst_177 : f32 to vector<1x128xf32>
    %672 = arith.subf %665, %671 : vector<1x128xf32>
    %673 = arith.mulf %670, %672 : vector<1x128xf32>
    %cst_178 = arith.constant 1.000000e+00 : f32
    %674 = vector.broadcast %cst_178 : f32 to vector<1x128xf32>
    %675 = arith.addf %674, %673 : vector<1x128xf32>
    %676 = arith.mulf %589, %675 : vector<1x128xf32>
    %677 = vector.broadcast %10 : f32 to vector<1x128xf32>
    %678 = arith.mulf %677, %660 : vector<1x128xf32>
    %679 = arith.select %646, %676, %678 : vector<1x128xi1>, vector<1x128xf32>
    %c0_i32_179 = arith.constant 0 : i32
    %680 = arith.cmpi eq, %c6_i32, %c0_i32_179 : i32
    %681 = arith.andi %0, %680 : i1
    %682 = arith.select %681, %614, %679 : vector<1x128xf32>
    %cst_180 = arith.constant 1.000000e-01 : f32
    %cst_181 = arith.constant 3.650000e+04 : f32
    %683 = vector.broadcast %cst_180 : f32 to vector<1x128xf32>
    %684 = arith.maximumf %683, %682 : vector<1x128xf32>
    %685 = vector.broadcast %cst_181 : f32 to vector<1x128xf32>
    %686 = arith.minimumf %685, %684 : vector<1x128xf32>
    %687 = arith.select %681, %620, %644 : vector<1x128xf32>
    %cst_182 = arith.constant 1.000000e+00 : f32
    %cst_183 = arith.constant 1.000000e+01 : f32
    %688 = vector.broadcast %cst_182 : f32 to vector<1x128xf32>
    %689 = arith.maximumf %688, %687 : vector<1x128xf32>
    %690 = vector.broadcast %cst_183 : f32 to vector<1x128xf32>
    %691 = arith.minimumf %690, %689 : vector<1x128xf32>
    %692 = arith.index_cast %c6_i32 : i32 to index
    %c0_184 = arith.constant 0 : index
    %c0_185 = arith.constant 0 : index
    %693 = vector.load %arg5[%692, %c0_184, %c0_185] : memref<8x1x128xf32, #tpu.memory_space<vmem>>, vector<1x1x128xf32>
    %694 = vector.shape_cast %693 : vector<1x1x128xf32> to vector<1x128xf32>
    %695 = vector.shape_cast %686 : vector<1x128xf32> to vector<1x1x128xf32>
    tpu.vector_store %arg5[%692, %c0_184, %c0_185], %695 {strides = array<i32>} : memref<8x1x128xf32, #tpu.memory_space<vmem>>, vector<1x1x128xf32>,
    %696 = arith.index_cast %c6_i32 : i32 to index
    %c0_186 = arith.constant 0 : index
    %c0_187 = arith.constant 0 : index
    %697 = vector.load %arg6[%696, %c0_186, %c0_187] : memref<8x1x128xf32, #tpu.memory_space<vmem>>, vector<1x1x128xf32>
    %698 = vector.shape_cast %697 : vector<1x1x128xf32> to vector<1x128xf32>
    %699 = vector.shape_cast %691 : vector<1x128xf32> to vector<1x1x128xf32>
    tpu.vector_store %arg6[%696, %c0_186, %c0_187], %699 {strides = array<i32>} : memref<8x1x128xf32, #tpu.memory_space<vmem>>, vector<1x1x128xf32>,
    %c7_i32 = arith.constant 7 : i32
    %700 = arith.index_cast %c7_i32 : i32 to index
    %c0_188 = arith.constant 0 : index
    %c0_189 = arith.constant 0 : index
    %701 = vector.load %arg3[%700, %c0_188, %c0_189] : memref<8x1x128xf32, #tpu.memory_space<vmem>>, vector<1x1x128xf32>
    %702 = vector.shape_cast %701 : vector<1x1x128xf32> to vector<1x128xf32>
    %703 = arith.index_cast %c7_i32 : i32 to index
    %c0_190 = arith.constant 0 : index
    %c0_191 = arith.constant 0 : index
    %704 = vector.load %arg4[%703, %c0_190, %c0_191] : memref<8x1x128xf32, #tpu.memory_space<vmem>>, vector<1x1x128xf32>
    %705 = vector.shape_cast %704 : vector<1x1x128xf32> to vector<1x128xf32>
    %cst_192 = arith.constant 1.000000e+00 : f32
    %706 = vector.broadcast %cst_192 : f32 to vector<1x128xf32>
    %707 = arith.subf %705, %706 : vector<1x128xf32>
    %708 = vector.broadcast %2 : f32 to vector<1x128xf32>
    %709 = arith.mulf %708, %707 : vector<1x128xf32>
    %710 = vector.broadcast %1 : f32 to vector<1x128xf32>
    %711 = arith.addf %710, %709 : vector<1x128xf32>
    %cst_193 = arith.constant 3.000000e+00 : f32
    %712 = vector.broadcast %cst_193 : f32 to vector<1x128xf32>
    %713 = arith.subf %705, %712 : vector<1x128xf32>
    %714 = vector.broadcast %4 : f32 to vector<1x128xf32>
    %715 = arith.mulf %714, %713 : vector<1x128xf32>
    %716 = vector.broadcast %3 : f32 to vector<1x128xf32>
    %717 = arith.addf %716, %715 : vector<1x128xf32>
    %718 = tpu.reciprocal %686 {approx = true} : vector<1x128xf32> -> vector<1x128xf32>
    %719 = arith.mulf %686, %718 : vector<1x128xf32>
    %cst_194 = arith.constant 2.000000e+00 : f32
    %720 = vector.broadcast %cst_194 : f32 to vector<1x128xf32>
    %721 = arith.subf %720, %719 : vector<1x128xf32>
    %722 = arith.mulf %718, %721 : vector<1x128xf32>
    %cst_195 = arith.constant -0.105360515 : f32
    %723 = vector.broadcast %cst_195 : f32 to vector<1x128xf32>
    %724 = arith.mulf %723, %702 : vector<1x128xf32>
    %725 = arith.mulf %724, %722 : vector<1x128xf32>
    %726 = math.exp %725 : vector<1x128xf32>
    %cst_196 = arith.constant 1.000000e+00 : f32
    %727 = vector.broadcast %cst_196 : f32 to vector<1x128xf32>
    %728 = arith.subf %727, %726 : vector<1x128xf32>
    %cst_197 = arith.constant 3.000000e+00 : f32
    %729 = vector.broadcast %cst_197 : f32 to vector<1x128xf32>
    %730 = arith.subf %705, %729 : vector<1x128xf32>
    %731 = vector.broadcast %5 : f32 to vector<1x128xf32>
    %732 = arith.mulf %731, %730 : vector<1x128xf32>
    %733 = arith.addf %691, %732 : vector<1x128xf32>
    %734 = vector.broadcast %16 : f32 to vector<1x128xf32>
    %735 = arith.mulf %734, %733 : vector<1x128xf32>
    %736 = vector.broadcast %15 : f32 to vector<1x128xf32>
    %737 = arith.addf %736, %735 : vector<1x128xf32>
    %cst_198 = arith.constant 1.000000e+00 : f32
    %cst_199 = arith.constant 1.000000e+01 : f32
    %738 = vector.broadcast %cst_198 : f32 to vector<1x128xf32>
    %739 = arith.maximumf %738, %737 : vector<1x128xf32>
    %740 = vector.broadcast %cst_199 : f32 to vector<1x128xf32>
    %741 = arith.minimumf %740, %739 : vector<1x128xf32>
    %cst_200 = arith.constant 1.000000e+00 : f32
    %742 = vector.broadcast %cst_200 : f32 to vector<1x128xf32>
    %743 = arith.cmpf ogt, %705, %742 : vector<1x128xf32>
    %744 = math.log %686 : vector<1x128xf32>
    %745 = math.log %741 : vector<1x128xf32>
    %746 = vector.broadcast %8 : f32 to vector<1x128xf32>
    %747 = arith.mulf %746, %744 : vector<1x128xf32>
    %748 = vector.broadcast %11 : f32 to vector<1x128xf32>
    %749 = arith.mulf %748, %745 : vector<1x128xf32>
    %750 = vector.broadcast %12 : f32 to vector<1x128xf32>
    %751 = arith.mulf %750, %744 : vector<1x128xf32>
    %752 = arith.addf %749, %751 : vector<1x128xf32>
    %753 = vector.broadcast %13 : f32 to vector<1x128xf32>
    %754 = arith.mulf %728, %753 : vector<1x128xf32>
    %755 = arith.addf %752, %754 : vector<1x128xf32>
    %756 = arith.select %743, %747, %755 : vector<1x128xi1>, vector<1x128xf32>
    %757 = math.exp %756 : vector<1x128xf32>
    %758 = vector.broadcast %9 : f32 to vector<1x128xf32>
    %759 = arith.mulf %728, %758 : vector<1x128xf32>
    %cst_201 = arith.constant 0.000000e+00 : f32
    %760 = vector.broadcast %cst_201 : f32 to vector<1x128xf32>
    %761 = arith.select %743, %759, %760 : vector<1x128xi1>, vector<1x128xf32>
    %762 = math.exp %761 : vector<1x128xf32>
    %cst_202 = arith.constant 1.100000e+01 : f32
    %763 = vector.broadcast %cst_202 : f32 to vector<1x128xf32>
    %764 = arith.subf %763, %741 : vector<1x128xf32>
    %765 = vector.broadcast %14 : f32 to vector<1x128xf32>
    %766 = arith.mulf %765, %764 : vector<1x128xf32>
    %767 = arith.mulf %766, %757 : vector<1x128xf32>
    %cst_203 = arith.constant 1.000000e+00 : f32
    %768 = vector.broadcast %cst_203 : f32 to vector<1x128xf32>
    %769 = arith.subf %762, %768 : vector<1x128xf32>
    %770 = arith.mulf %767, %769 : vector<1x128xf32>
    %cst_204 = arith.constant 1.000000e+00 : f32
    %771 = vector.broadcast %cst_204 : f32 to vector<1x128xf32>
    %772 = arith.addf %771, %770 : vector<1x128xf32>
    %773 = arith.mulf %686, %772 : vector<1x128xf32>
    %774 = vector.broadcast %10 : f32 to vector<1x128xf32>
    %775 = arith.mulf %774, %757 : vector<1x128xf32>
    %776 = arith.select %743, %773, %775 : vector<1x128xi1>, vector<1x128xf32>
    %c0_i32_205 = arith.constant 0 : i32
    %777 = arith.cmpi eq, %c7_i32, %c0_i32_205 : i32
    %778 = arith.andi %0, %777 : i1
    %779 = arith.select %778, %711, %776 : vector<1x128xf32>
    %cst_206 = arith.constant 1.000000e-01 : f32
    %cst_207 = arith.constant 3.650000e+04 : f32
    %780 = vector.broadcast %cst_206 : f32 to vector<1x128xf32>
    %781 = arith.maximumf %780, %779 : vector<1x128xf32>
    %782 = vector.broadcast %cst_207 : f32 to vector<1x128xf32>
    %783 = arith.minimumf %782, %781 : vector<1x128xf32>
    %784 = arith.select %778, %717, %741 : vector<1x128xf32>
    %cst_208 = arith.constant 1.000000e+00 : f32
    %cst_209 = arith.constant 1.000000e+01 : f32
    %785 = vector.broadcast %cst_208 : f32 to vector<1x128xf32>
    %786 = arith.maximumf %785, %784 : vector<1x128xf32>
    %787 = vector.broadcast %cst_209 : f32 to vector<1x128xf32>
    %788 = arith.minimumf %787, %786 : vector<1x128xf32>
    %789 = arith.index_cast %c7_i32 : i32 to index
    %c0_210 = arith.constant 0 : index
    %c0_211 = arith.constant 0 : index
    %790 = vector.load %arg5[%789, %c0_210, %c0_211] : memref<8x1x128xf32, #tpu.memory_space<vmem>>, vector<1x1x128xf32>
    %791 = vector.shape_cast %790 : vector<1x1x128xf32> to vector<1x128xf32>
    %792 = vector.shape_cast %783 : vector<1x128xf32> to vector<1x1x128xf32>
    tpu.vector_store %arg5[%789, %c0_210, %c0_211], %792 {strides = array<i32>} : memref<8x1x128xf32, #tpu.memory_space<vmem>>, vector<1x1x128xf32>,
    %793 = arith.index_cast %c7_i32 : i32 to index
    %c0_212 = arith.constant 0 : index
    %c0_213 = arith.constant 0 : index
    %794 = vector.load %arg6[%793, %c0_212, %c0_213] : memref<8x1x128xf32, #tpu.memory_space<vmem>>, vector<1x1x128xf32>
    %795 = vector.shape_cast %794 : vector<1x1x128xf32> to vector<1x128xf32>
    %796 = vector.shape_cast %788 : vector<1x128xf32> to vector<1x1x128xf32>
    tpu.vector_store %arg6[%793, %c0_212, %c0_213], %796 {strides = array<i32>} : memref<8x1x128xf32, #tpu.memory_space<vmem>>, vector<1x1x128xf32>,
    %c8_i32 = arith.constant 8 : i32
    %c0_214 = arith.constant 0 : index
    %c0_215 = arith.constant 0 : index
    %797 = vector.load %arg7[%c0_214, %c0_215] : memref<1x128xf32, #tpu.memory_space<vmem>>, vector<1x128xf32>
    tpu.vector_store %arg7[%c0_214, %c0_215], %783 {strides = array<i32>} : memref<1x128xf32, #tpu.memory_space<vmem>>, vector<1x128xf32>,
    %c0_216 = arith.constant 0 : index
    %c0_217 = arith.constant 0 : index
    %798 = vector.load %arg8[%c0_216, %c0_217] : memref<1x128xf32, #tpu.memory_space<vmem>>, vector<1x128xf32>
    tpu.vector_store %arg8[%c0_216, %c0_217], %788 {strides = array<i32>} : memref<1x128xf32, #tpu.memory_space<vmem>>, vector<1x128xf32>,
    return
  }
  func.func @transform_0(%arg0: i32, %arg1: i32) -> i32 {
    %c0_i32 = arith.constant 0 : i32
    %c0_i32_0 = arith.constant 0 : i32
    return %c0_i32 : i32
  }
  func.func @transform_1(%arg0: i32, %arg1: i32) -> (i32, i32, i32) {
    %c0_i32 = arith.constant 0 : i32
    %c0_i32_0 = arith.constant 0 : i32
    return %arg1, %arg0, %c0_i32 : i32, i32, i32
  }
  func.func @transform_2(%arg0: i32, %arg1: i32) -> (i32, i32, i32) {
    %c0_i32 = arith.constant 0 : i32
    %c0_i32_0 = arith.constant 0 : i32
    return %arg1, %arg0, %c0_i32 : i32, i32, i32
  }
  func.func @transform_3(%arg0: i32, %arg1: i32) -> (i32, i32, i32) {
    %c0_i32 = arith.constant 0 : i32
    %c0_i32_0 = arith.constant 0 : i32
    return %arg1, %arg0, %c0_i32 : i32, i32, i32
  }
  func.func @transform_4(%arg0: i32, %arg1: i32) -> (i32, i32, i32) {
    %c0_i32 = arith.constant 0 : i32
    %c0_i32_0 = arith.constant 0 : i32
    return %arg1, %arg0, %c0_i32 : i32, i32, i32
  }
}

</mosaic_0001>

<llo_original>
// kernel: fsrs3_forward.1
$region0: #{fsrs3_forward.1}
  #allocation0 [shape = 'u32[]', space=smem, size = 0x4, offset = 0x4, fixed_abs, tag = 'smem constant byte address 0x4 - core index']
  #allocation1 [shape = 'u32[144,128]{1,0:T(1,128)}', space=vmem, size = 0x12000, scoped, tag = 'internal scratch']
  #allocation2 [shape = 'f32[1,128]{1,0:T(1,128)}', space=vmem, size = 0x200, scoped, tag = 'scratch operand']
  #allocation3 [shape = 'f32[1,128]{1,0:T(1,128)}', space=vmem, size = 0x200, scoped, tag = 'scratch operand']
  %s0 = inlined_call_operand.vmem [shape: f32[13], index: 0, kind: input, shape index: {}]
  %s1 = inlined_call_operand.vmem [shape: f32[8,1,128], index: 1, kind: input, shape index: {}]
  %s2 = inlined_call_operand.vmem [shape: f32[8,1,128], index: 2, kind: input, shape index: {}]
  %s3 = inlined_call_operand.vmem [shape: f32[8,1,128], index: 3, kind: output, shape index: {0}]
  %s4 = inlined_call_operand.vmem [shape: f32[8,1,128], index: 4, kind: output, shape index: {1}]
  %5 = xla_tuple %s3, %s4
  %s6 = sld [smem:[#allocation0]]
  $region38: #{fsrs3_forward.1} parent=0
    _
  %s8 = ssub.s32 1, %s6
  %s9 = scalar_select 0, %s8, %s6
  $region1: #{fsrs3_forward.1} parent=0
    #allocation4 [shape = 'u8[512]{0}', space=smem, size = 0x200, scoped, tag = 'input window, operand 0, single buffered']
    #allocation5 [shape = 's32[1]{0}', space=sflag, size = 0x4, scoped, tag = 'scoped memory for fsrs3_forward.1']
    %10 = vsyncpa [#allocation5], 0
    // Predicated region
    $region2: #{fsrs3_forward.1} parent=1 // pred_check
      _
    $region3: #{fsrs3_forward.1} parent=1 // pred_check_branch
      %12 = sbr.rel (0) target = $region5
    $region4: #{fsrs3_forward.1} parent=1 // pred_region
      %s14 = ssub.s32 16, 16
      %15 = vsyncadd [#allocation5], %s14
      %s17 = sshll.u32 %s0, 4
      %s18 = int_to_ptr.vmem [resolvable:$true] %s17
      %20 = dma.vmem_to_smem %s18, 16, [#allocation4], [#allocation5]
    $region5: #{fsrs3_forward.1} parent=1 // pred_fallthru
      _
    // Predicated region
    $region6: #{fsrs3_forward.1} parent=1 // pred_check
      _
    $region7: #{fsrs3_forward.1} parent=1 // pred_check_branch
      %22 = sbr.rel (0) target = $region9
    $region8: #{fsrs3_forward.1} parent=1 // pred_region
      _
    $region9: #{fsrs3_forward.1} parent=1 // pred_fallthru
      _
    // Predicated region
    $region10: #{fsrs3_forward.1} parent=1 // pred_check
      _
    $region11: #{fsrs3_forward.1} parent=1 // pred_check_branch
      %24 = sbr.rel (0) target = $region13
    $region12: #{fsrs3_forward.1} parent=1 // pred_region
      _
    $region13: #{fsrs3_forward.1} parent=1 // pred_fallthru
      _
    // Predicated region
    $region14: #{fsrs3_forward.1} parent=1 // pred_check
      _
    $region15: #{fsrs3_forward.1} parent=1 // pred_check_branch
      %26 = sbr.rel (0) target = $region17
    $region16: #{fsrs3_forward.1} parent=1 // pred_region
      %27 = dma.done [#allocation5], 16
    $region17: #{fsrs3_forward.1} parent=1 // pred_fallthru
      _
    %28 = sfence
    %p29 = scmp.eq.s32.totalorder 0, 0
    %s30 = sld [smem:[#allocation4]]
    %s31 = sld [smem:[#allocation4 + $0x1]]
    %s32 = sld [smem:[#allocation4 + $0x2]]
    %s33 = sld [smem:[#allocation4 + $0x3]]
    %s34 = sld [smem:[#allocation4 + $0x4]]
    %s35 = sld [smem:[#allocation4 + $0x5]]
    %s36 = sld [smem:[#allocation4 + $0x6]]
    %s37 = sld [smem:[#allocation4 + $0x7]]
    %s38 = sld [smem:[#allocation4 + $0x8]]
    %s39 = sld [smem:[#allocation4 + $0x9]]
    %s40 = sld [smem:[#allocation4 + $0xa]]
    %s41 = sld [smem:[#allocation4 + $0xb]]
    %s42 = sld [smem:[#allocation4 + $0xc]]
    %v43 = vstv %s36
    %v44 = vmul.f32 %v43, 1.442695
    %v45 = vpow.pop %v44
    %s46 = vtos %v45
    %s47 = smul.f32 %s35, %s32
    %s48 = ssub.f32 1.0, %s35
    // Predicated region
    $region18: #{fsrs3_forward.1} parent=1 // pred_check
      %p49 = pneg %p29
    $region19: #{fsrs3_forward.1} parent=1 // pred_check_branch
      %51 = sbr.rel (%p49) target = $region21
    $region20: #{fsrs3_forward.1} parent=1 // pred_region
      %52 = vst [vmem:[#allocation2] sm:$0x1] 1.0
      %53 = vst [vmem:[#allocation3] sm:$0x1] 1.0
    $region21: #{fsrs3_forward.1} parent=1 // pred_fallthru
      _
    %v54 = vld [vmem:[#allocation2] sm:$0x1]
    %v55 = vld [vmem:[#allocation3] sm:$0x1]
    %v56 = vld [vmem:[%s1] sm:$0x1]
    %v57 = vld [vmem:[%s2] sm:$0x1]
    %v58 = vsub.f32 %v57, 1.0
    %v59 = vstv %s31
    %v60 = vmul.f32 %v59, %v58
    %v61 = vstv %s30
    %v62 = vadd.f32 %v61, %v60
    %v63 = vsub.f32 %v57, 3.0
    %v64 = vstv %s33
    %v65 = vmul.f32 %v64, %v63
    %v66 = vstv %s32
    %v67 = vadd.f32 %v66, %v65
    %v68 = vrcp.pop %v54
    %v69 = vmul.f32 %v54, %v68
    %v70 = vsub.f32 2.0, %v69
    %v71 = vmul.f32 %v68, %v70
    %v72 = vmul.f32 %v56, -0.105360515
    %v73 = vmul.f32 %v72, %v71
    %v74 = vmul.f32 %v73, 1.442695
    %v75 = vpow.pop %v74
    %v76 = vsub.f32 1.0, %v75
    %v77 = vstv %s34
    %v78 = vmul.f32 %v77, %v63
    %v79 = vadd.f32 %v55, %v78
    %v80 = vstv %s48
    %v81 = vmul.f32 %v80, %v79
    %v82 = vstv %s47
    %v83 = vadd.f32 %v82, %v81
    %v84 = vmax.f32 %v83, 1.0
    %v85 = vmin.f32 %v84, 10.0
    %vm86 = vcmp.gt.f32.partialorder %v57, 1.0
    %v87 = vlog2.pop %v54
    %v88 = vmul.f32 %v87, 0.6931472
    %v89 = vlog2.pop %v85
    %v90 = vmul.f32 %v89, 0.6931472
    %v91 = vstv %s37
    %v92 = vmul.f32 %v91, %v88
    %v93 = vstv %s40
    %v94 = vmul.f32 %v93, %v90
    %v95 = vstv %s41
    %v96 = vmul.f32 %v95, %v88
    %v97 = vadd.f32 %v94, %v96
    %v98 = vstv %s42
    %v99 = vmul.f32 %v76, %v98
    %v100 = vadd.f32 %v97, %v99
    %v101 = vsel %vm86, %v92, %v100
    %v102 = vmul.f32 %v101, 1.442695
    %v103 = vpow.pop %v102
    %v104 = vstv %s38
    %v105 = vmul.f32 %v76, %v104
    %v106 = vsel %vm86, %v105, 0.0
    %v107 = vmul.f32 %v106, 1.442695
    %v108 = vpow.pop %v107
    %v109 = vsub.f32 11.0, %v85
    %v110 = vstv %s46
    %v111 = vmul.f32 %v110, %v109
    %v112 = vmul.f32 %v111, %v103
    %v113 = vsub.f32 %v108, 1.0
    %v114 = vmul.f32 %v112, %v113
    %v115 = vadd.f32 %v114, 1.0
    %v116 = vmul.f32 %v54, %v115
    %v117 = vstv %s39
    %v118 = vmul.f32 %v117, %v103
    %v119 = vsel %vm86, %v116, %v118
    %s120 = scalar_select %p29, 1, 0
    %v121 = vstv %s120
    %vm122 = vcmp.eq.s32.totalorder %v121, 1
    %v123 = vsel %vm122, %v62, %v119
    %v124 = vmax.f32 %v123, 0.1
    %v125 = vmin.f32 %v124, 36500.0
    %v126 = vsel %vm122, %v67, %v85
    %v127 = vmax.f32 %v126, 1.0
    %v128 = vmin.f32 %v127, 10.0
    %129 = vst [vmem:[%s3] sm:$0x1] %v125
    %130 = vst [vmem:[%s4] sm:$0x1] %v128
    %s131 = scalar_lea.vmem %s1, 1
    %v132 = vld [vmem:[%s131] sm:$0x1]
    %s133 = scalar_lea.vmem %s2, 1
    %v134 = vld [vmem:[%s133] sm:$0x1]
    %v135 = vrcp.pop %v125
    %v136 = vmul.f32 %v125, %v135
    %v137 = vsub.f32 2.0, %v136
    %v138 = vmul.f32 %v135, %v137
    %v139 = vmul.f32 %v132, -0.105360515
    %v140 = vmul.f32 %v139, %v138
    %v141 = vmul.f32 %v140, 1.442695
    %v142 = vpow.pop %v141
    %v143 = vsub.f32 1.0, %v142
    %v144 = vsub.f32 %v134, 3.0
    %v145 = vmul.f32 %v77, %v144
    %v146 = vadd.f32 %v128, %v145
    %v147 = vmul.f32 %v80, %v146
    %v148 = vadd.f32 %v82, %v147
    %v149 = vmax.f32 %v148, 1.0
    %v150 = vmin.f32 %v149, 10.0
    %vm151 = vcmp.gt.f32.partialorder %v134, 1.0
    %v152 = vlog2.pop %v125
    %v153 = vmul.f32 %v152, 0.6931472
    %v154 = vlog2.pop %v150
    %v155 = vmul.f32 %v154, 0.6931472
    %v156 = vmul.f32 %v91, %v153
    %v157 = vmul.f32 %v93, %v155
    %v158 = vmul.f32 %v95, %v153
    %v159 = vadd.f32 %v157, %v158
    %v160 = vmul.f32 %v143, %v98
    %v161 = vadd.f32 %v159, %v160
    %v162 = vsel %vm151, %v156, %v161
    %v163 = vmul.f32 %v162, 1.442695
    %v164 = vpow.pop %v163
    %v165 = vmul.f32 %v143, %v104
    %v166 = vsel %vm151, %v165, 0.0
    %v167 = vmul.f32 %v166, 1.442695
    %v168 = vpow.pop %v167
    %v169 = vsub.f32 11.0, %v150
    %v170 = vmul.f32 %v110, %v169
    %v171 = vmul.f32 %v170, %v164
    %v172 = vsub.f32 %v168, 1.0
    %v173 = vmul.f32 %v171, %v172
    %v174 = vadd.f32 %v173, 1.0
    %v175 = vmul.f32 %v125, %v174
    %v176 = vmul.f32 %v117, %v164
    %v177 = vsel %vm151, %v175, %v176
    %v178 = vmax.f32 %v177, 0.1
    %v179 = vmin.f32 %v178, 36500.0
    %v180 = vmax.f32 %v150, 1.0
    %v181 = vmin.f32 %v180, 10.0
    %s182 = scalar_lea.vmem %s3, 1
    %183 = vst [vmem:[%s182] sm:$0x1] %v179
    %s184 = scalar_lea.vmem %s4, 1
    %185 = vst [vmem:[%s184] sm:$0x1] %v181
    %s186 = scalar_lea.vmem %s1, 2
    %v187 = vld [vmem:[%s186] sm:$0x1]
    %s188 = scalar_lea.vmem %s2, 2
    %v189 = vld [vmem:[%s188] sm:$0x1]
    %v190 = vrcp.pop %v179
    %v191 = vmul.f32 %v179, %v190
    %v192 = vsub.f32 2.0, %v191
    %v193 = vmul.f32 %v190, %v192
    %v194 = vmul.f32 %v187, -0.105360515
    %v195 = vmul.f32 %v194, %v193
    %v196 = vmul.f32 %v195, 1.442695
    %v197 = vpow.pop %v196
    %v198 = vsub.f32 1.0, %v197
    %v199 = vsub.f32 %v189, 3.0
    %v200 = vmul.f32 %v77, %v199
    %v201 = vadd.f32 %v181, %v200
    %v202 = vmul.f32 %v80, %v201
    %v203 = vadd.f32 %v82, %v202
    %v204 = vmax.f32 %v203, 1.0
    %v205 = vmin.f32 %v204, 10.0
    %vm206 = vcmp.gt.f32.partialorder %v189, 1.0
    %v207 = vlog2.pop %v179
    %v208 = vmul.f32 %v207, 0.6931472
    %v209 = vlog2.pop %v205
    %v210 = vmul.f32 %v209, 0.6931472
    %v211 = vmul.f32 %v91, %v208
    %v212 = vmul.f32 %v93, %v210
    %v213 = vmul.f32 %v95, %v208
    %v214 = vadd.f32 %v212, %v213
    %v215 = vmul.f32 %v198, %v98
    %v216 = vadd.f32 %v214, %v215
    %v217 = vsel %vm206, %v211, %v216
    %v218 = vmul.f32 %v217, 1.442695
    %v219 = vpow.pop %v218
    %v220 = vmul.f32 %v198, %v104
    %v221 = vsel %vm206, %v220, 0.0
    %v222 = vmul.f32 %v221, 1.442695
    %v223 = vpow.pop %v222
    %v224 = vsub.f32 11.0, %v205
    %v225 = vmul.f32 %v110, %v224
    %v226 = vmul.f32 %v225, %v219
    %v227 = vsub.f32 %v223, 1.0
    %v228 = vmul.f32 %v226, %v227
    %v229 = vadd.f32 %v228, 1.0
    %v230 = vmul.f32 %v179, %v229
    %v231 = vmul.f32 %v117, %v219
    %v232 = vsel %vm206, %v230, %v231
    %v233 = vmax.f32 %v232, 0.1
    %v234 = vmin.f32 %v233, 36500.0
    %v235 = vmax.f32 %v205, 1.0
    %v236 = vmin.f32 %v235, 10.0
    %s237 = scalar_lea.vmem %s3, 2
    %238 = vst [vmem:[%s237] sm:$0x1] %v234
    %s239 = scalar_lea.vmem %s4, 2
    %240 = vst [vmem:[%s239] sm:$0x1] %v236
    %s241 = scalar_lea.vmem %s1, 3
    %v242 = vld [vmem:[%s241] sm:$0x1]
    %s243 = scalar_lea.vmem %s2, 3
    %v244 = vld [vmem:[%s243] sm:$0x1]
    %v245 = vrcp.pop %v234
    %v246 = vmul.f32 %v234, %v245
    %v247 = vsub.f32 2.0, %v246
    %v248 = vmul.f32 %v245, %v247
    %v249 = vmul.f32 %v242, -0.105360515
    %v250 = vmul.f32 %v249, %v248
    %v251 = vmul.f32 %v250, 1.442695
    %v252 = vpow.pop %v251
    %v253 = vsub.f32 1.0, %v252
    %v254 = vsub.f32 %v244, 3.0
    %v255 = vmul.f32 %v77, %v254
    %v256 = vadd.f32 %v236, %v255
    %v257 = vmul.f32 %v80, %v256
    %v258 = vadd.f32 %v82, %v257
    %v259 = vmax.f32 %v258, 1.0
    %v260 = vmin.f32 %v259, 10.0
    %vm261 = vcmp.gt.f32.partialorder %v244, 1.0
    %v262 = vlog2.pop %v234
    %v263 = vmul.f32 %v262, 0.6931472
    %v264 = vlog2.pop %v260
    %v265 = vmul.f32 %v264, 0.6931472
    %v266 = vmul.f32 %v91, %v263
    %v267 = vmul.f32 %v93, %v265
    %v268 = vmul.f32 %v95, %v263
    %v269 = vadd.f32 %v267, %v268
    %v270 = vmul.f32 %v253, %v98
    %v271 = vadd.f32 %v269, %v270
    %v272 = vsel %vm261, %v266, %v271
    %v273 = vmul.f32 %v272, 1.442695
    %v274 = vpow.pop %v273
    %v275 = vmul.f32 %v253, %v104
    %v276 = vsel %vm261, %v275, 0.0
    %v277 = vmul.f32 %v276, 1.442695
    %v278 = vpow.pop %v277
    %v279 = vsub.f32 11.0, %v260
    %v280 = vmul.f32 %v110, %v279
    %v281 = vmul.f32 %v280, %v274
    %v282 = vsub.f32 %v278, 1.0
    %v283 = vmul.f32 %v281, %v282
    %v284 = vadd.f32 %v283, 1.0
    %v285 = vmul.f32 %v234, %v284
    %v286 = vmul.f32 %v117, %v274
    %v287 = vsel %vm261, %v285, %v286
    %v288 = vmax.f32 %v287, 0.1
    %v289 = vmin.f32 %v288, 36500.0
    %v290 = vmax.f32 %v260, 1.0
    %v291 = vmin.f32 %v290, 10.0
    %s292 = scalar_lea.vmem %s3, 3
    %293 = vst [vmem:[%s292] sm:$0x1] %v289
    %s294 = scalar_lea.vmem %s4, 3
    %295 = vst [vmem:[%s294] sm:$0x1] %v291
    %s296 = scalar_lea.vmem %s1, 4
    %v297 = vld [vmem:[%s296] sm:$0x1]
    %s298 = scalar_lea.vmem %s2, 4
    %v299 = vld [vmem:[%s298] sm:$0x1]
    %v300 = vrcp.pop %v289
    %v301 = vmul.f32 %v289, %v300
    %v302 = vsub.f32 2.0, %v301
    %v303 = vmul.f32 %v300, %v302
    %v304 = vmul.f32 %v297, -0.105360515
    %v305 = vmul.f32 %v304, %v303
    %v306 = vmul.f32 %v305, 1.442695
    %v307 = vpow.pop %v306
    %v308 = vsub.f32 1.0, %v307
    %v309 = vsub.f32 %v299, 3.0
    %v310 = vmul.f32 %v77, %v309
    %v311 = vadd.f32 %v291, %v310
    %v312 = vmul.f32 %v80, %v311
    %v313 = vadd.f32 %v82, %v312
    %v314 = vmax.f32 %v313, 1.0
    %v315 = vmin.f32 %v314, 10.0
    %vm316 = vcmp.gt.f32.partialorder %v299, 1.0
    %v317 = vlog2.pop %v289
    %v318 = vmul.f32 %v317, 0.6931472
    %v319 = vlog2.pop %v315
    %v320 = vmul.f32 %v319, 0.6931472
    %v321 = vmul.f32 %v91, %v318
    %v322 = vmul.f32 %v93, %v320
    %v323 = vmul.f32 %v95, %v318
    %v324 = vadd.f32 %v322, %v323
    %v325 = vmul.f32 %v308, %v98
    %v326 = vadd.f32 %v324, %v325
    %v327 = vsel %vm316, %v321, %v326
    %v328 = vmul.f32 %v327, 1.442695
    %v329 = vpow.pop %v328
    %v330 = vmul.f32 %v308, %v104
    %v331 = vsel %vm316, %v330, 0.0
    %v332 = vmul.f32 %v331, 1.442695
    %v333 = vpow.pop %v332
    %v334 = vsub.f32 11.0, %v315
    %v335 = vmul.f32 %v110, %v334
    %v336 = vmul.f32 %v335, %v329
    %v337 = vsub.f32 %v333, 1.0
    %v338 = vmul.f32 %v336, %v337
    %v339 = vadd.f32 %v338, 1.0
    %v340 = vmul.f32 %v289, %v339
    %v341 = vmul.f32 %v117, %v329
    %v342 = vsel %vm316, %v340, %v341
    %v343 = vmax.f32 %v342, 0.1
    %v344 = vmin.f32 %v343, 36500.0
    %v345 = vmax.f32 %v315, 1.0
    %v346 = vmin.f32 %v345, 10.0
    %s347 = scalar_lea.vmem %s3, 4
    %348 = vst [vmem:[%s347] sm:$0x1] %v344
    %s349 = scalar_lea.vmem %s4, 4
    %350 = vst [vmem:[%s349] sm:$0x1] %v346
    %s351 = scalar_lea.vmem %s1, 5
    %v352 = vld [vmem:[%s351] sm:$0x1]
    %s353 = scalar_lea.vmem %s2, 5
    %v354 = vld [vmem:[%s353] sm:$0x1]
    %v355 = vrcp.pop %v344
    %v356 = vmul.f32 %v344, %v355
    %v357 = vsub.f32 2.0, %v356
    %v358 = vmul.f32 %v355, %v357
    %v359 = vmul.f32 %v352, -0.105360515
    %v360 = vmul.f32 %v359, %v358
    %v361 = vmul.f32 %v360, 1.442695
    %v362 = vpow.pop %v361
    %v363 = vsub.f32 1.0, %v362
    %v364 = vsub.f32 %v354, 3.0
    %v365 = vmul.f32 %v77, %v364
    %v366 = vadd.f32 %v346, %v365
    %v367 = vmul.f32 %v80, %v366
    %v368 = vadd.f32 %v82, %v367
    %v369 = vmax.f32 %v368, 1.0
    %v370 = vmin.f32 %v369, 10.0
    %vm371 = vcmp.gt.f32.partialorder %v354, 1.0
    %v372 = vlog2.pop %v344
    %v373 = vmul.f32 %v372, 0.6931472
    %v374 = vlog2.pop %v370
    %v375 = vmul.f32 %v374, 0.6931472
    %v376 = vmul.f32 %v91, %v373
    %v377 = vmul.f32 %v93, %v375
    %v378 = vmul.f32 %v95, %v373
    %v379 = vadd.f32 %v377, %v378
    %v380 = vmul.f32 %v363, %v98
    %v381 = vadd.f32 %v379, %v380
    %v382 = vsel %vm371, %v376, %v381
    %v383 = vmul.f32 %v382, 1.442695
    %v384 = vpow.pop %v383
    %v385 = vmul.f32 %v363, %v104
    %v386 = vsel %vm371, %v385, 0.0
    %v387 = vmul.f32 %v386, 1.442695
    %v388 = vpow.pop %v387
    %v389 = vsub.f32 11.0, %v370
    %v390 = vmul.f32 %v110, %v389
    %v391 = vmul.f32 %v390, %v384
    %v392 = vsub.f32 %v388, 1.0
    %v393 = vmul.f32 %v391, %v392
    %v394 = vadd.f32 %v393, 1.0
    %v395 = vmul.f32 %v344, %v394
    %v396 = vmul.f32 %v117, %v384
    %v397 = vsel %vm371, %v395, %v396
    %v398 = vmax.f32 %v397, 0.1
    %v399 = vmin.f32 %v398, 36500.0
    %v400 = vmax.f32 %v370, 1.0
    %v401 = vmin.f32 %v400, 10.0
    %s402 = scalar_lea.vmem %s3, 5
    %403 = vst [vmem:[%s402] sm:$0x1] %v399
    %s404 = scalar_lea.vmem %s4, 5
    %405 = vst [vmem:[%s404] sm:$0x1] %v401
    %s406 = scalar_lea.vmem %s1, 6
    %v407 = vld [vmem:[%s406] sm:$0x1]
    %s408 = scalar_lea.vmem %s2, 6
    %v409 = vld [vmem:[%s408] sm:$0x1]
    %v410 = vrcp.pop %v399
    %v411 = vmul.f32 %v399, %v410
    %v412 = vsub.f32 2.0, %v411
    %v413 = vmul.f32 %v410, %v412
    %v414 = vmul.f32 %v407, -0.105360515
    %v415 = vmul.f32 %v414, %v413
    %v416 = vmul.f32 %v415, 1.442695
    %v417 = vpow.pop %v416
    %v418 = vsub.f32 1.0, %v417
    %v419 = vsub.f32 %v409, 3.0
    %v420 = vmul.f32 %v77, %v419
    %v421 = vadd.f32 %v401, %v420
    %v422 = vmul.f32 %v80, %v421
    %v423 = vadd.f32 %v82, %v422
    %v424 = vmax.f32 %v423, 1.0
    %v425 = vmin.f32 %v424, 10.0
    %vm426 = vcmp.gt.f32.partialorder %v409, 1.0
    %v427 = vlog2.pop %v399
    %v428 = vmul.f32 %v427, 0.6931472
    %v429 = vlog2.pop %v425
    %v430 = vmul.f32 %v429, 0.6931472
    %v431 = vmul.f32 %v91, %v428
    %v432 = vmul.f32 %v93, %v430
    %v433 = vmul.f32 %v95, %v428
    %v434 = vadd.f32 %v432, %v433
    %v435 = vmul.f32 %v418, %v98
    %v436 = vadd.f32 %v434, %v435
    %v437 = vsel %vm426, %v431, %v436
    %v438 = vmul.f32 %v437, 1.442695
    %v439 = vpow.pop %v438
    %v440 = vmul.f32 %v418, %v104
    %v441 = vsel %vm426, %v440, 0.0
    %v442 = vmul.f32 %v441, 1.442695
    %v443 = vpow.pop %v442
    %v444 = vsub.f32 11.0, %v425
    %v445 = vmul.f32 %v110, %v444
    %v446 = vmul.f32 %v445, %v439
    %v447 = vsub.f32 %v443, 1.0
    %v448 = vmul.f32 %v446, %v447
    %v449 = vadd.f32 %v448, 1.0
    %v450 = vmul.f32 %v399, %v449
    %v451 = vmul.f32 %v117, %v439
    %v452 = vsel %vm426, %v450, %v451
    %v453 = vmax.f32 %v452, 0.1
    %v454 = vmin.f32 %v453, 36500.0
    %v455 = vmax.f32 %v425, 1.0
    %v456 = vmin.f32 %v455, 10.0
    %s457 = scalar_lea.vmem %s3, 6
    %458 = vst [vmem:[%s457] sm:$0x1] %v454
    %s459 = scalar_lea.vmem %s4, 6
    %460 = vst [vmem:[%s459] sm:$0x1] %v456
    %s461 = scalar_lea.vmem %s1, 7
    %v462 = vld [vmem:[%s461] sm:$0x1]
    %s463 = scalar_lea.vmem %s2, 7
    %v464 = vld [vmem:[%s463] sm:$0x1]
    %v465 = vrcp.pop %v454
    %v466 = vmul.f32 %v454, %v465
    %v467 = vsub.f32 2.0, %v466
    %v468 = vmul.f32 %v465, %v467
    %v469 = vmul.f32 %v462, -0.105360515
    %v470 = vmul.f32 %v469, %v468
    %v471 = vmul.f32 %v470, 1.442695
    %v472 = vpow.pop %v471
    %v473 = vsub.f32 1.0, %v472
    %v474 = vsub.f32 %v464, 3.0
    %v475 = vmul.f32 %v77, %v474
    %v476 = vadd.f32 %v456, %v475
    %v477 = vmul.f32 %v80, %v476
    %v478 = vadd.f32 %v82, %v477
    %v479 = vmax.f32 %v478, 1.0
    %v480 = vmin.f32 %v479, 10.0
    %vm481 = vcmp.gt.f32.partialorder %v464, 1.0
    %v482 = vlog2.pop %v454
    %v483 = vmul.f32 %v482, 0.6931472
    %v484 = vlog2.pop %v480
    %v485 = vmul.f32 %v484, 0.6931472
    %v486 = vmul.f32 %v91, %v483
    %v487 = vmul.f32 %v93, %v485
    %v488 = vmul.f32 %v95, %v483
    %v489 = vadd.f32 %v487, %v488
    %v490 = vmul.f32 %v473, %v98
    %v491 = vadd.f32 %v489, %v490
    %v492 = vsel %vm481, %v486, %v491
    %v493 = vmul.f32 %v492, 1.442695
    %v494 = vpow.pop %v493
    %v495 = vmul.f32 %v473, %v104
    %v496 = vsel %vm481, %v495, 0.0
    %v497 = vmul.f32 %v496, 1.442695
    %v498 = vpow.pop %v497
    %v499 = vsub.f32 11.0, %v480
    %v500 = vmul.f32 %v110, %v499
    %v501 = vmul.f32 %v500, %v494
    %v502 = vsub.f32 %v498, 1.0
    %v503 = vmul.f32 %v501, %v502
    %v504 = vadd.f32 %v503, 1.0
    %v505 = vmul.f32 %v454, %v504
    %v506 = vmul.f32 %v117, %v494
    %v507 = vsel %vm481, %v505, %v506
    %v508 = vmax.f32 %v507, 0.1
    %v509 = vmin.f32 %v508, 36500.0
    %v510 = vmax.f32 %v480, 1.0
    %v511 = vmin.f32 %v510, 10.0
    %s512 = scalar_lea.vmem %s3, 7
    %513 = vst [vmem:[%s512] sm:$0x1] %v509
    %s514 = scalar_lea.vmem %s4, 7
    %515 = vst [vmem:[%s514] sm:$0x1] %v511
    %516 = vst [vmem:[#allocation2] sm:$0x1] %v509
    %517 = vst [vmem:[#allocation3] sm:$0x1] %v511
    // Predicated region
    $region22: #{fsrs3_forward.1} parent=1 // pred_check
      _
    $region23: #{fsrs3_forward.1} parent=1 // pred_check_branch
      %519 = sbr.rel (0) target = $region25
    $region24: #{fsrs3_forward.1} parent=1 // pred_region
      _
    $region25: #{fsrs3_forward.1} parent=1 // pred_fallthru
      _
    // Predicated region
    $region26: #{fsrs3_forward.1} parent=1 // pred_check
      _
    $region27: #{fsrs3_forward.1} parent=1 // pred_check_branch
      %521 = sbr.rel (0) target = $region29
    $region28: #{fsrs3_forward.1} parent=1 // pred_region
      _
    $region29: #{fsrs3_forward.1} parent=1 // pred_fallthru
      _
    // Predicated region
    $region30: #{fsrs3_forward.1} parent=1 // pred_check
      _
    $region31: #{fsrs3_forward.1} parent=1 // pred_check_branch
      %523 = sbr.rel (0) target = $region33
    $region32: #{fsrs3_forward.1} parent=1 // pred_region
      _
    $region33: #{fsrs3_forward.1} parent=1 // pred_fallthru
      _
    // Predicated region
    $region34: #{fsrs3_forward.1} parent=1 // pred_check
      _
    $region35: #{fsrs3_forward.1} parent=1 // pred_check_branch
      %525 = sbr.rel (0) target = $region37
    $region36: #{fsrs3_forward.1} parent=1 // pred_region
      _
    $region37: #{fsrs3_forward.1} parent=1 // pred_fallthru
      _
    %526 = vsyncpa [#allocation5], 1

</llo_original>
